<compile_context>
chip_gen: v7x
topology: tpu7x:2x2x1
jax: 0.10.0
libtpu: 0.0.40
codegen_flags: <defaults>
</compile_context>

<pallas_src>
from functools import partial

import jax
import jax.numpy as jnp
from jax.experimental import pallas as pl
from jax.experimental.pallas import tpu as pltpu

NUM_LAYERS = 6
IN_CH = 2              # input_channel of each coupling layer
HIDDEN = 256           # Function_s_t hidden width
LEAKY_SLOPE = 0.01     # nn.LeakyReLU default negative_slope
OUT_W = 128            # lane-dense merged output width (cols: z0, z1, ldj, pad)

# mask_type sequence from RealNVP.__init__: '01','10','01','10','01','10'
# '01' -> mask=[0,1]: column 1 passes through, column 0 is transformed.
# '10' -> mask=[1,0]: column 0 passes through, column 1 is transformed.
KEPT_COL = (1, 0, 1, 0, 1, 0)
UPD_COL = tuple(1 - j for j in KEPT_COL)


def _leaky_relu(x):
    return jnp.where(x >= 0, x, LEAKY_SLOPE * x)


def _default_ew_dtype():
    """bf16 elementwise hidden activations on v6e/v7x, f32 on v5e/older."""
    try:
        kind = jax.devices()[0].device_kind.lower()
    except Exception:
        return jnp.float32
    return jnp.bfloat16 if any(t in kind for t in ("v6", "v7", "7x")) else jnp.float32


def realnvp_kernel(x_ref, w1a_ref, b1_ref, w2_ref, b2_ref, w3s_ref, w3t_ref,
                   b3_ref, out_ref, *, ew_dtype):
    x = x_ref[...].astype(jnp.float32)            # (TILE_B, 2)
    cols = [x[:, 0:1], x[:, 1:2]]                 # per-feature columns
    ldj = jnp.zeros_like(cols[0])                 # (TILE_B, 1)
    mm_dtype = w2_ref.dtype                       # bf16 (perf) or f32 (test)

    for l in range(NUM_LAYERS):                   # unrolled: 6 couplings
        j = KEPT_COL[l]                           # pass-through column
        k = 1 - j                                 # updated column

        # --- layer 1 of Function_s_t: the coupling mask is one-hot, so the
        #     K=2 matmul is a single VPU broadcast FMA on the live column.
        h = cols[j] * w1a_ref[l:l + 1, :] + b1_ref[l:l + 1, :]   # (TILE_B, 256) f32
        # Cast once here (bf16 on v6e/v7x) so LeakyReLU and the matmul operand
        # share one narrow repr; stays f32 on v5e.
        h = _leaky_relu(h.astype(ew_dtype))

        # --- layer 2: the ONLY MXU pass per coupling layer
        #     (narrow operands, f32 accumulate).
        h = jnp.dot(h.astype(mm_dtype), w2_ref[l],
                    preferred_element_type=jnp.float32) + b2_ref[l:l + 1, :]
        h = _leaky_relu(h)                                        # f32

        # --- layer 3 (256 -> 2): off the MXU.  A (M,256)x(256,2) matmul would
        #     cost roughly a full MXU pass for ~1/128 of the FLOPs, so do it as
        #     two VPU multiplies + XLU cross-lane reductions instead.
        s_pre = jnp.sum(h * w3s_ref[l:l + 1, :], axis=-1, keepdims=True) + b3_ref[l, 0]
        t = jnp.sum(h * w3t_ref[l:l + 1, :], axis=-1, keepdims=True) + b3_ref[l, 1]
        s = jnp.tanh(s_pre)                       # (TILE_B, 1), EUP

        # coupling update: kept column unchanged, updated column transformed.
        cols[k] = cols[k] * jnp.exp(s) + t
        ldj = ldj + s                             # tanh(0)=0 on masked column

    # Lane-dense merged output: col0=z0, col1=z1, col2=sum_ldj, rest zero.
    lane = jax.lax.broadcasted_iota(jnp.int32, out_ref.shape, 1)
    out_ref[...] = jnp.where(lane == 0, cols[0],
                   jnp.where(lane == 1, cols[1],
                   jnp.where(lane == 2, ldj, 0.0)))


def init_params(key):
    """Deterministic synthetic weights matching the PyTorch module's shapes."""
    ks = jax.random.split(key, 6)

    def u(k, shape, fan_in):
        bound = 1.0 / jnp.sqrt(fan_in)
        return jax.random.uniform(k, shape, jnp.float32, -bound, bound)

    w1 = u(ks[0], (NUM_LAYERS, IN_CH, HIDDEN), IN_CH)
    b1 = u(ks[1], (NUM_LAYERS, HIDDEN), IN_CH)
    w2 = u(ks[2], (NUM_LAYERS, HIDDEN, HIDDEN), HIDDEN)
    b2 = u(ks[3], (NUM_LAYERS, HIDDEN), HIDDEN)
    w3 = u(ks[4], (NUM_LAYERS, HIDDEN, 2 * IN_CH), HIDDEN)
    b3 = u(ks[5], (NUM_LAYERS, 2 * IN_CH), HIDDEN)

    m01 = jnp.array([0.0, 1.0], jnp.float32)
    m10 = jnp.array([1.0, 0.0], jnp.float32)
    masks = jnp.stack([m01, m10, m01, m10, m01, m10], axis=0)  # (6, 2)

    return masks, w1, b1, w2, b2, w3, b3


def _round_up(a, m):
    return -(-a // m) * m


def _choose_tile(B, tile_b):
    """Clamp tile to the batch and keep >=2 grid steps when possible so the
    'parallel' batch axis can shard across v7x's 2 TensorCores."""
    b8 = max(8, _round_up(B, 8))
    tb = min(tile_b, b8)
    if b8 // tb < 2 and b8 >= 16:
        tb = max(8, _round_up(-(-b8 // 2), 8))
    return tb


@partial(jax.jit, static_argnums=(2, 3, 4))
def _realnvp_forward(x, params, tile_b, mm_dtype, ew_dtype):
    masks, w1, b1, w2, b2, w3, b3 = params
    del masks  # mask pattern is static (KEPT_COL); handled at pack time.

    # w1 row for the single live input column per layer: (6, 256)
    w1a = jnp.stack([w1[l, KEPT_COL[l], :] for l in range(NUM_LAYERS)], axis=0)
    # w3 columns for the live outputs (s, t of the updated column), repacked so
    # the 256 axis is the lane dim: (6, 256) each.  Biases go to SMEM.
    w3s = jnp.stack([w3[l, :, UPD_COL[l]] for l in range(NUM_LAYERS)], axis=0)
    w3t = jnp.stack([w3[l, :, IN_CH + UPD_COL[l]] for l in range(NUM_LAYERS)], axis=0)
    b3p = jnp.stack([jnp.stack([b3[l, UPD_COL[l]], b3[l, IN_CH + UPD_COL[l]]])
                     for l in range(NUM_LAYERS)], axis=0)           # (6, 2)

    w2c = w2.astype(mm_dtype)

    B = x.shape[0]
    tb = _choose_tile(B, tile_b)
    B_pad = _round_up(B, tb)
    if B_pad != B:
        x = jnp.pad(x, ((0, B_pad - B), (0, 0)))

    out = pl.pallas_call(
        partial(realnvp_kernel, ew_dtype=ew_dtype),
        out_shape=jax.ShapeDtypeStruct((B_pad, OUT_W), jnp.float32),
        grid=(B_pad // tb,),
        in_specs=[
            pl.BlockSpec((tb, IN_CH), lambda i: (i, 0)),                   # x tile
            # Weights: constant index_maps -> same block revisited every grid
            # step, so they are DMA'd into VMEM once and kept resident.
            pl.BlockSpec((NUM_LAYERS, HIDDEN), lambda i: (0, 0)),          # w1a
            pl.BlockSpec((NUM_LAYERS, HIDDEN), lambda i: (0, 0)),          # b1
            pl.BlockSpec((NUM_LAYERS, HIDDEN, HIDDEN), lambda i: (0, 0, 0)),  # w2
            pl.BlockSpec((NUM_LAYERS, HIDDEN), lambda i: (0, 0)),          # b2
            pl.BlockSpec((NUM_LAYERS, HIDDEN), lambda i: (0, 0)),          # w3s
            pl.BlockSpec((NUM_LAYERS, HIDDEN), lambda i: (0, 0)),          # w3t
            pl.BlockSpec(memory_space=pltpu.MemorySpace.SMEM),             # b3 (6,2)
        ],
        out_specs=pl.BlockSpec((tb, OUT_W), lambda i: (i, 0)),
        compiler_params=pltpu.CompilerParams(
            dimension_semantics=("parallel",)),
    )(x, w1a, b1, w2c, b2, w3s, w3t, b3p)

    z = out[:B, :IN_CH]
    sum_ldj = out[:B, IN_CH]
    return z, sum_ldj


def realnvp_forward(x, params, *, tile_b=512, mm_dtype=jnp.bfloat16, ew_dtype=None):
    if ew_dtype is None:
        ew_dtype = _default_ew_dtype()
    return _realnvp_forward(x, params, int(tile_b),
                            jnp.dtype(mm_dtype), jnp.dtype(ew_dtype))


def realnvp_reference(x, params, w2_dtype=jnp.float32, ew_dtype=jnp.float32):
    """Pure-JAX reference of the PyTorch forward.  With f32 everywhere it is
    the exact module semantics; the dtype knobs reproduce the kernel's
    precision choices for matched-precision checks."""
    masks, w1, b1, w2, b2, w3, b3 = params
    ldj = jnp.zeros((x.shape[0],), jnp.float32)
    for l in range(NUM_LAYERS):
        mask = masks[l:l + 1, :]
        inv_mask = 1.0 - mask
        x1 = x * mask
        h = x1 @ w1[l] + b1[l][None, :]
        h = _leaky_relu(h.astype(ew_dtype))
        h = jnp.dot(h.astype(w2_dtype), w2[l].astype(w2_dtype),
                    preferred_element_type=jnp.float32) + b2[l][None, :]
        h = _leaky_relu(h)
        hout = (h @ w3[l] + b3[l][None, :]).astype(jnp.float32)
        s = jnp.tanh(hout[:, :IN_CH] * inv_mask)
        t = hout[:, IN_CH:] * inv_mask
        x = x1 + inv_mask * (x * jnp.exp(s) + t)
        ldj = ldj + jnp.sum(s, axis=1)
    return x, ldj


if __name__ == "__main__":
    # TODO(synk): only the forward (reverse=False) path is implemented; the
    # inverse pass of the module is out of scope here.
    key = jax.random.PRNGKey(0)
    kx, kp = jax.random.split(key)
    B = 8
    x = jax.random.normal(kx, (B, IN_CH), jnp.float32)
    params = init_params(kp)

    # 1) f32 everywhere: exact module semantics, tight tolerance.
    z32, ldj32 = realnvp_forward(x, params, mm_dtype=jnp.float32,
                                 ew_dtype=jnp.float32)
    jax.block_until_ready((z32, ldj32))
    z_ref, ldj_ref = realnvp_reference(x, params)
    assert jnp.allclose(z32, z_ref, atol=1e-4, rtol=1e-4), "f32 z mismatch"
    assert jnp.allclose(ldj32, ldj_ref, atol=1e-4, rtol=1e-4), "f32 ldj mismatch"

    # 2) Performance default (bf16 MXU operands, device-gated elementwise
    #    dtype) on a multi-tile grid with batch padding, checked against the
    #    matched-precision reference.
    B2 = 1000
    x2 = jax.random.normal(jax.random.PRNGKey(1), (B2, IN_CH), jnp.float32)
    z2, ldj2 = realnvp_forward(x2, params)
    jax.block_until_ready((z2, ldj2))
    ew = _default_ew_dtype()
    z2_ref, ldj2_ref = realnvp_reference(x2, params, w2_dtype=jnp.bfloat16,
                                         ew_dtype=ew)
    assert jnp.allclose(z2, z2_ref, atol=1e-2, rtol=1e-2), "bf16 z mismatch"
    assert jnp.allclose(ldj2, ldj2_ref, atol=1e-2, rtol=1e-2), "bf16 ldj mismatch"

    print("KERNEL_OK")
</pallas_src>

<mosaic_0001>
module attributes {stable_mosaic.version = 11 : i64} {
  func.func @realnvp_kernel(%arg0: i32, %arg1: memref<8x2xf32, #tpu.memory_space<vmem>>, %arg2: memref<6x256xf32, #tpu.memory_space<vmem>>, %arg3: memref<6x256xf32, #tpu.memory_space<vmem>>, %arg4: memref<6x256x256xf32, #tpu.memory_space<vmem>>, %arg5: memref<6x256xf32, #tpu.memory_space<vmem>>, %arg6: memref<6x256xf32, #tpu.memory_space<vmem>>, %arg7: memref<6x256xf32, #tpu.memory_space<vmem>>, %arg8: memref<6x2xf32, #tpu.memory_space<smem>>, %arg9: memref<8x128xf32, #tpu.memory_space<vmem>>) attributes {dimension_semantics = [#tpu.dimension_semantics<parallel>], iteration_bounds = array<i64: 1>, scalar_prefetch = 0 : i64, scratch_operands = 0 : i64, tpu.core_type = #tpu.core_type<tc>, window_params = [{transform_indices = @transform_0, window_bounds = array<i64: 8, 2>}, {pipeline_mode = #tpu.pipeline_mode<synchronous>, transform_indices = @transform_1, window_bounds = array<i64: 6, 256>}, {pipeline_mode = #tpu.pipeline_mode<synchronous>, transform_indices = @transform_2, window_bounds = array<i64: 6, 256>}, {pipeline_mode = #tpu.pipeline_mode<synchronous>, transform_indices = @transform_3, window_bounds = array<i64: 6, 256, 256>}, {pipeline_mode = #tpu.pipeline_mode<synchronous>, transform_indices = @transform_4, window_bounds = array<i64: 6, 256>}, {pipeline_mode = #tpu.pipeline_mode<synchronous>, transform_indices = @transform_5, window_bounds = array<i64: 6, 256>}, {pipeline_mode = #tpu.pipeline_mode<synchronous>, transform_indices = @transform_6, window_bounds = array<i64: 6, 256>}, {transform_indices = @transform_7, window_bounds = array<i64: 6, 2>}, {transform_indices = @transform_8, window_bounds = array<i64: 8, 128>}]} {
    %c0 = arith.constant 0 : index
    %c0_0 = arith.constant 0 : index
    %0 = vector.load %arg1[%c0, %c0_0] : memref<8x2xf32, #tpu.memory_space<vmem>>, vector<8x2xf32>
    %1 = vector.extract_strided_slice %0 {offsets = [0, 0], sizes = [8, 1], strides = [1, 1]} : vector<8x2xf32> to vector<8x1xf32>
    %2 = vector.extract_strided_slice %0 {offsets = [0, 1], sizes = [8, 1], strides = [1, 1]} : vector<8x2xf32> to vector<8x1xf32>
    %cst = arith.constant 0.000000e+00 : f32
    %3 = vector.broadcast %cst : f32 to vector<8x1xf32>
    %c0_1 = arith.constant 0 : index
    %c0_2 = arith.constant 0 : index
    %4 = vector.load %arg2[%c0_1, %c0_2] : memref<6x256xf32, #tpu.memory_space<vmem>>, vector<1x256xf32>
    %5 = vector.broadcast %2 : vector<8x1xf32> to vector<8x256xf32>
    %6 = vector.broadcast %4 : vector<1x256xf32> to vector<8x256xf32>
    %7 = arith.mulf %5, %6 : vector<8x256xf32>
    %c0_3 = arith.constant 0 : index
    %c0_4 = arith.constant 0 : index
    %8 = vector.load %arg3[%c0_3, %c0_4] : memref<6x256xf32, #tpu.memory_space<vmem>>, vector<1x256xf32>
    %9 = vector.broadcast %8 : vector<1x256xf32> to vector<8x256xf32>
    %10 = arith.addf %7, %9 : vector<8x256xf32>
    %cst_5 = arith.constant 0.000000e+00 : f32
    %11 = vector.broadcast %cst_5 : f32 to vector<8x256xf32>
    %12 = arith.cmpf oge, %10, %11 : vector<8x256xf32>
    %cst_6 = arith.constant 0.00999999977 : f32
    %13 = vector.broadcast %cst_6 : f32 to vector<8x256xf32>
    %14 = arith.mulf %13, %10 : vector<8x256xf32>
    %15 = arith.select %12, %10, %14 : vector<8x256xi1>, vector<8x256xf32>
    %c0_7 = arith.constant 0 : index
    %c0_8 = arith.constant 0 : index
    %c0_9 = arith.constant 0 : index
    %16 = vector.load %arg4[%c0_7, %c0_8, %c0_9] : memref<6x256x256xf32, #tpu.memory_space<vmem>>, vector<1x256x256xf32>
    %17 = vector.shape_cast %16 : vector<1x256x256xf32> to vector<256x256xf32>
    %cst_10 = arith.constant dense<0.000000e+00> : vector<8x256xf32>
    %18 = tpu.matmul %15, %17, %cst_10 {dimension_numbers = #tpu.dot_dimension_numbers<[1], [0], [0], [1], [0, 0, 1, 1], [], []>} : vector<8x256xf32>, vector<256x256xf32>, vector<8x256xf32> -> vector<8x256xf32>
    %c0_11 = arith.constant 0 : index
    %c0_12 = arith.constant 0 : index
    %19 = vector.load %arg5[%c0_11, %c0_12] : memref<6x256xf32, #tpu.memory_space<vmem>>, vector<1x256xf32>
    %20 = vector.broadcast %19 : vector<1x256xf32> to vector<8x256xf32>
    %21 = arith.addf %18, %20 : vector<8x256xf32>
    %cst_13 = arith.constant 0.000000e+00 : f32
    %22 = vector.broadcast %cst_13 : f32 to vector<8x256xf32>
    %23 = arith.cmpf oge, %21, %22 : vector<8x256xf32>
    %cst_14 = arith.constant 0.00999999977 : f32
    %24 = vector.broadcast %cst_14 : f32 to vector<8x256xf32>
    %25 = arith.mulf %24, %21 : vector<8x256xf32>
    %26 = arith.select %23, %21, %25 : vector<8x256xi1>, vector<8x256xf32>
    %c0_15 = arith.constant 0 : index
    %c0_16 = arith.constant 0 : index
    %27 = vector.load %arg6[%c0_15, %c0_16] : memref<6x256xf32, #tpu.memory_space<vmem>>, vector<1x256xf32>
    %28 = vector.broadcast %27 : vector<1x256xf32> to vector<8x256xf32>
    %29 = arith.mulf %26, %28 : vector<8x256xf32>
    %cst_17 = arith.constant dense<0.000000e+00> : vector<8xf32>
    %30 = vector.multi_reduction <add>, %29, %cst_17 [1] : vector<8x256xf32> to vector<8xf32>
    %31 = vector.shape_cast %30 : vector<8xf32> to vector<8x1xf32>
    %c0_18 = arith.constant 0 : index
    %c0_19 = arith.constant 0 : index
    %32 = memref.load %arg8[%c0_18, %c0_19] : memref<6x2xf32, #tpu.memory_space<smem>>
    %33 = vector.broadcast %32 : f32 to vector<8x1xf32>
    %34 = arith.addf %31, %33 : vector<8x1xf32>
    %c0_20 = arith.constant 0 : index
    %c0_21 = arith.constant 0 : index
    %35 = vector.load %arg7[%c0_20, %c0_21] : memref<6x256xf32, #tpu.memory_space<vmem>>, vector<1x256xf32>
    %36 = vector.broadcast %35 : vector<1x256xf32> to vector<8x256xf32>
    %37 = arith.mulf %26, %36 : vector<8x256xf32>
    %cst_22 = arith.constant dense<0.000000e+00> : vector<8xf32>
    %38 = vector.multi_reduction <add>, %37, %cst_22 [1] : vector<8x256xf32> to vector<8xf32>
    %39 = vector.shape_cast %38 : vector<8xf32> to vector<8x1xf32>
    %c0_23 = arith.constant 0 : index
    %c1 = arith.constant 1 : index
    %40 = memref.load %arg8[%c0_23, %c1] : memref<6x2xf32, #tpu.memory_space<smem>>
    %41 = vector.broadcast %40 : f32 to vector<8x1xf32>
    %42 = arith.addf %39, %41 : vector<8x1xf32>
    %43 = math.tanh %34 : vector<8x1xf32>
    %44 = math.exp %43 : vector<8x1xf32>
    %45 = arith.mulf %1, %44 : vector<8x1xf32>
    %46 = arith.addf %45, %42 : vector<8x1xf32>
    %47 = arith.addf %3, %43 : vector<8x1xf32>
    %c1_24 = arith.constant 1 : index
    %c0_25 = arith.constant 0 : index
    %48 = vector.load %arg2[%c1_24, %c0_25] : memref<6x256xf32, #tpu.memory_space<vmem>>, vector<1x256xf32>
    %49 = vector.broadcast %46 : vector<8x1xf32> to vector<8x256xf32>
    %50 = vector.broadcast %48 : vector<1x256xf32> to vector<8x256xf32>
    %51 = arith.mulf %49, %50 : vector<8x256xf32>
    %c1_26 = arith.constant 1 : index
    %c0_27 = arith.constant 0 : index
    %52 = vector.load %arg3[%c1_26, %c0_27] : memref<6x256xf32, #tpu.memory_space<vmem>>, vector<1x256xf32>
    %53 = vector.broadcast %52 : vector<1x256xf32> to vector<8x256xf32>
    %54 = arith.addf %51, %53 : vector<8x256xf32>
    %cst_28 = arith.constant 0.000000e+00 : f32
    %55 = vector.broadcast %cst_28 : f32 to vector<8x256xf32>
    %56 = arith.cmpf oge, %54, %55 : vector<8x256xf32>
    %cst_29 = arith.constant 0.00999999977 : f32
    %57 = vector.broadcast %cst_29 : f32 to vector<8x256xf32>
    %58 = arith.mulf %57, %54 : vector<8x256xf32>
    %59 = arith.select %56, %54, %58 : vector<8x256xi1>, vector<8x256xf32>
    %c1_30 = arith.constant 1 : index
    %c0_31 = arith.constant 0 : index
    %c0_32 = arith.constant 0 : index
    %60 = vector.load %arg4[%c1_30, %c0_31, %c0_32] : memref<6x256x256xf32, #tpu.memory_space<vmem>>, vector<1x256x256xf32>
    %61 = vector.shape_cast %60 : vector<1x256x256xf32> to vector<256x256xf32>
    %cst_33 = arith.constant dense<0.000000e+00> : vector<8x256xf32>
    %62 = tpu.matmul %59, %61, %cst_33 {dimension_numbers = #tpu.dot_dimension_numbers<[1], [0], [0], [1], [0, 0, 1, 1], [], []>} : vector<8x256xf32>, vector<256x256xf32>, vector<8x256xf32> -> vector<8x256xf32>
    %c1_34 = arith.constant 1 : index
    %c0_35 = arith.constant 0 : index
    %63 = vector.load %arg5[%c1_34, %c0_35] : memref<6x256xf32, #tpu.memory_space<vmem>>, vector<1x256xf32>
    %64 = vector.broadcast %63 : vector<1x256xf32> to vector<8x256xf32>
    %65 = arith.addf %62, %64 : vector<8x256xf32>
    %cst_36 = arith.constant 0.000000e+00 : f32
    %66 = vector.broadcast %cst_36 : f32 to vector<8x256xf32>
    %67 = arith.cmpf oge, %65, %66 : vector<8x256xf32>
    %cst_37 = arith.constant 0.00999999977 : f32
    %68 = vector.broadcast %cst_37 : f32 to vector<8x256xf32>
    %69 = arith.mulf %68, %65 : vector<8x256xf32>
    %70 = arith.select %67, %65, %69 : vector<8x256xi1>, vector<8x256xf32>
    %c1_38 = arith.constant 1 : index
    %c0_39 = arith.constant 0 : index
    %71 = vector.load %arg6[%c1_38, %c0_39] : memref<6x256xf32, #tpu.memory_space<vmem>>, vector<1x256xf32>
    %72 = vector.broadcast %71 : vector<1x256xf32> to vector<8x256xf32>
    %73 = arith.mulf %70, %72 : vector<8x256xf32>
    %cst_40 = arith.constant dense<0.000000e+00> : vector<8xf32>
    %74 = vector.multi_reduction <add>, %73, %cst_40 [1] : vector<8x256xf32> to vector<8xf32>
    %75 = vector.shape_cast %74 : vector<8xf32> to vector<8x1xf32>
    %c1_41 = arith.constant 1 : index
    %c0_42 = arith.constant 0 : index
    %76 = memref.load %arg8[%c1_41, %c0_42] : memref<6x2xf32, #tpu.memory_space<smem>>
    %77 = vector.broadcast %76 : f32 to vector<8x1xf32>
    %78 = arith.addf %75, %77 : vector<8x1xf32>
    %c1_43 = arith.constant 1 : index
    %c0_44 = arith.constant 0 : index
    %79 = vector.load %arg7[%c1_43, %c0_44] : memref<6x256xf32, #tpu.memory_space<vmem>>, vector<1x256xf32>
    %80 = vector.broadcast %79 : vector<1x256xf32> to vector<8x256xf32>
    %81 = arith.mulf %70, %80 : vector<8x256xf32>
    %cst_45 = arith.constant dense<0.000000e+00> : vector<8xf32>
    %82 = vector.multi_reduction <add>, %81, %cst_45 [1] : vector<8x256xf32> to vector<8xf32>
    %83 = vector.shape_cast %82 : vector<8xf32> to vector<8x1xf32>
    %c1_46 = arith.constant 1 : index
    %c1_47 = arith.constant 1 : index
    %84 = memref.load %arg8[%c1_46, %c1_47] : memref<6x2xf32, #tpu.memory_space<smem>>
    %85 = vector.broadcast %84 : f32 to vector<8x1xf32>
    %86 = arith.addf %83, %85 : vector<8x1xf32>
    %87 = math.tanh %78 : vector<8x1xf32>
    %88 = math.exp %87 : vector<8x1xf32>
    %89 = arith.mulf %2, %88 : vector<8x1xf32>
    %90 = arith.addf %89, %86 : vector<8x1xf32>
    %91 = arith.addf %47, %87 : vector<8x1xf32>
    %c2 = arith.constant 2 : index
    %c0_48 = arith.constant 0 : index
    %92 = vector.load %arg2[%c2, %c0_48] : memref<6x256xf32, #tpu.memory_space<vmem>>, vector<1x256xf32>
    %93 = vector.broadcast %90 : vector<8x1xf32> to vector<8x256xf32>
    %94 = vector.broadcast %92 : vector<1x256xf32> to vector<8x256xf32>
    %95 = arith.mulf %93, %94 : vector<8x256xf32>
    %c2_49 = arith.constant 2 : index
    %c0_50 = arith.constant 0 : index
    %96 = vector.load %arg3[%c2_49, %c0_50] : memref<6x256xf32, #tpu.memory_space<vmem>>, vector<1x256xf32>
    %97 = vector.broadcast %96 : vector<1x256xf32> to vector<8x256xf32>
    %98 = arith.addf %95, %97 : vector<8x256xf32>
    %cst_51 = arith.constant 0.000000e+00 : f32
    %99 = vector.broadcast %cst_51 : f32 to vector<8x256xf32>
    %100 = arith.cmpf oge, %98, %99 : vector<8x256xf32>
    %cst_52 = arith.constant 0.00999999977 : f32
    %101 = vector.broadcast %cst_52 : f32 to vector<8x256xf32>
    %102 = arith.mulf %101, %98 : vector<8x256xf32>
    %103 = arith.select %100, %98, %102 : vector<8x256xi1>, vector<8x256xf32>
    %c2_53 = arith.constant 2 : index
    %c0_54 = arith.constant 0 : index
    %c0_55 = arith.constant 0 : index
    %104 = vector.load %arg4[%c2_53, %c0_54, %c0_55] : memref<6x256x256xf32, #tpu.memory_space<vmem>>, vector<1x256x256xf32>
    %105 = vector.shape_cast %104 : vector<1x256x256xf32> to vector<256x256xf32>
    %cst_56 = arith.constant dense<0.000000e+00> : vector<8x256xf32>
    %106 = tpu.matmul %103, %105, %cst_56 {dimension_numbers = #tpu.dot_dimension_numbers<[1], [0], [0], [1], [0, 0, 1, 1], [], []>} : vector<8x256xf32>, vector<256x256xf32>, vector<8x256xf32> -> vector<8x256xf32>
    %c2_57 = arith.constant 2 : index
    %c0_58 = arith.constant 0 : index
    %107 = vector.load %arg5[%c2_57, %c0_58] : memref<6x256xf32, #tpu.memory_space<vmem>>, vector<1x256xf32>
    %108 = vector.broadcast %107 : vector<1x256xf32> to vector<8x256xf32>
    %109 = arith.addf %106, %108 : vector<8x256xf32>
    %cst_59 = arith.constant 0.000000e+00 : f32
    %110 = vector.broadcast %cst_59 : f32 to vector<8x256xf32>
    %111 = arith.cmpf oge, %109, %110 : vector<8x256xf32>
    %cst_60 = arith.constant 0.00999999977 : f32
    %112 = vector.broadcast %cst_60 : f32 to vector<8x256xf32>
    %113 = arith.mulf %112, %109 : vector<8x256xf32>
    %114 = arith.select %111, %109, %113 : vector<8x256xi1>, vector<8x256xf32>
    %c2_61 = arith.constant 2 : index
    %c0_62 = arith.constant 0 : index
    %115 = vector.load %arg6[%c2_61, %c0_62] : memref<6x256xf32, #tpu.memory_space<vmem>>, vector<1x256xf32>
    %116 = vector.broadcast %115 : vector<1x256xf32> to vector<8x256xf32>
    %117 = arith.mulf %114, %116 : vector<8x256xf32>
    %cst_63 = arith.constant dense<0.000000e+00> : vector<8xf32>
    %118 = vector.multi_reduction <add>, %117, %cst_63 [1] : vector<8x256xf32> to vector<8xf32>
    %119 = vector.shape_cast %118 : vector<8xf32> to vector<8x1xf32>
    %c2_64 = arith.constant 2 : index
    %c0_65 = arith.constant 0 : index
    %120 = memref.load %arg8[%c2_64, %c0_65] : memref<6x2xf32, #tpu.memory_space<smem>>
    %121 = vector.broadcast %120 : f32 to vector<8x1xf32>
    %122 = arith.addf %119, %121 : vector<8x1xf32>
    %c2_66 = arith.constant 2 : index
    %c0_67 = arith.constant 0 : index
    %123 = vector.load %arg7[%c2_66, %c0_67] : memref<6x256xf32, #tpu.memory_space<vmem>>, vector<1x256xf32>
    %124 = vector.broadcast %123 : vector<1x256xf32> to vector<8x256xf32>
    %125 = arith.mulf %114, %124 : vector<8x256xf32>
    %cst_68 = arith.constant dense<0.000000e+00> : vector<8xf32>
    %126 = vector.multi_reduction <add>, %125, %cst_68 [1] : vector<8x256xf32> to vector<8xf32>
    %127 = vector.shape_cast %126 : vector<8xf32> to vector<8x1xf32>
    %c2_69 = arith.constant 2 : index
    %c1_70 = arith.constant 1 : index
    %128 = memref.load %arg8[%c2_69, %c1_70] : memref<6x2xf32, #tpu.memory_space<smem>>
    %129 = vector.broadcast %128 : f32 to vector<8x1xf32>
    %130 = arith.addf %127, %129 : vector<8x1xf32>
    %131 = math.tanh %122 : vector<8x1xf32>
    %132 = math.exp %131 : vector<8x1xf32>
    %133 = arith.mulf %46, %132 : vector<8x1xf32>
    %134 = arith.addf %133, %130 : vector<8x1xf32>
    %135 = arith.addf %91, %131 : vector<8x1xf32>
    %c3 = arith.constant 3 : index
    %c0_71 = arith.constant 0 : index
    %136 = vector.load %arg2[%c3, %c0_71] : memref<6x256xf32, #tpu.memory_space<vmem>>, vector<1x256xf32>
    %137 = vector.broadcast %134 : vector<8x1xf32> to vector<8x256xf32>
    %138 = vector.broadcast %136 : vector<1x256xf32> to vector<8x256xf32>
    %139 = arith.mulf %137, %138 : vector<8x256xf32>
    %c3_72 = arith.constant 3 : index
    %c0_73 = arith.constant 0 : index
    %140 = vector.load %arg3[%c3_72, %c0_73] : memref<6x256xf32, #tpu.memory_space<vmem>>, vector<1x256xf32>
    %141 = vector.broadcast %140 : vector<1x256xf32> to vector<8x256xf32>
    %142 = arith.addf %139, %141 : vector<8x256xf32>
    %cst_74 = arith.constant 0.000000e+00 : f32
    %143 = vector.broadcast %cst_74 : f32 to vector<8x256xf32>
    %144 = arith.cmpf oge, %142, %143 : vector<8x256xf32>
    %cst_75 = arith.constant 0.00999999977 : f32
    %145 = vector.broadcast %cst_75 : f32 to vector<8x256xf32>
    %146 = arith.mulf %145, %142 : vector<8x256xf32>
    %147 = arith.select %144, %142, %146 : vector<8x256xi1>, vector<8x256xf32>
    %c3_76 = arith.constant 3 : index
    %c0_77 = arith.constant 0 : index
    %c0_78 = arith.constant 0 : index
    %148 = vector.load %arg4[%c3_76, %c0_77, %c0_78] : memref<6x256x256xf32, #tpu.memory_space<vmem>>, vector<1x256x256xf32>
    %149 = vector.shape_cast %148 : vector<1x256x256xf32> to vector<256x256xf32>
    %cst_79 = arith.constant dense<0.000000e+00> : vector<8x256xf32>
    %150 = tpu.matmul %147, %149, %cst_79 {dimension_numbers = #tpu.dot_dimension_numbers<[1], [0], [0], [1], [0, 0, 1, 1], [], []>} : vector<8x256xf32>, vector<256x256xf32>, vector<8x256xf32> -> vector<8x256xf32>
    %c3_80 = arith.constant 3 : index
    %c0_81 = arith.constant 0 : index
    %151 = vector.load %arg5[%c3_80, %c0_81] : memref<6x256xf32, #tpu.memory_space<vmem>>, vector<1x256xf32>
    %152 = vector.broadcast %151 : vector<1x256xf32> to vector<8x256xf32>
    %153 = arith.addf %150, %152 : vector<8x256xf32>
    %cst_82 = arith.constant 0.000000e+00 : f32
    %154 = vector.broadcast %cst_82 : f32 to vector<8x256xf32>
    %155 = arith.cmpf oge, %153, %154 : vector<8x256xf32>
    %cst_83 = arith.constant 0.00999999977 : f32
    %156 = vector.broadcast %cst_83 : f32 to vector<8x256xf32>
    %157 = arith.mulf %156, %153 : vector<8x256xf32>
    %158 = arith.select %155, %153, %157 : vector<8x256xi1>, vector<8x256xf32>
    %c3_84 = arith.constant 3 : index
    %c0_85 = arith.constant 0 : index
    %159 = vector.load %arg6[%c3_84, %c0_85] : memref<6x256xf32, #tpu.memory_space<vmem>>, vector<1x256xf32>
    %160 = vector.broadcast %159 : vector<1x256xf32> to vector<8x256xf32>
    %161 = arith.mulf %158, %160 : vector<8x256xf32>
    %cst_86 = arith.constant dense<0.000000e+00> : vector<8xf32>
    %162 = vector.multi_reduction <add>, %161, %cst_86 [1] : vector<8x256xf32> to vector<8xf32>
    %163 = vector.shape_cast %162 : vector<8xf32> to vector<8x1xf32>
    %c3_87 = arith.constant 3 : index
    %c0_88 = arith.constant 0 : index
    %164 = memref.load %arg8[%c3_87, %c0_88] : memref<6x2xf32, #tpu.memory_space<smem>>
    %165 = vector.broadcast %164 : f32 to vector<8x1xf32>
    %166 = arith.addf %163, %165 : vector<8x1xf32>
    %c3_89 = arith.constant 3 : index
    %c0_90 = arith.constant 0 : index
    %167 = vector.load %arg7[%c3_89, %c0_90] : memref<6x256xf32, #tpu.memory_space<vmem>>, vector<1x256xf32>
    %168 = vector.broadcast %167 : vector<1x256xf32> to vector<8x256xf32>
    %169 = arith.mulf %158, %168 : vector<8x256xf32>
    %cst_91 = arith.constant dense<0.000000e+00> : vector<8xf32>
    %170 = vector.multi_reduction <add>, %169, %cst_91 [1] : vector<8x256xf32> to vector<8xf32>
    %171 = vector.shape_cast %170 : vector<8xf32> to vector<8x1xf32>
    %c3_92 = arith.constant 3 : index
    %c1_93 = arith.constant 1 : index
    %172 = memref.load %arg8[%c3_92, %c1_93] : memref<6x2xf32, #tpu.memory_space<smem>>
    %173 = vector.broadcast %172 : f32 to vector<8x1xf32>
    %174 = arith.addf %171, %173 : vector<8x1xf32>
    %175 = math.tanh %166 : vector<8x1xf32>
    %176 = math.exp %175 : vector<8x1xf32>
    %177 = arith.mulf %90, %176 : vector<8x1xf32>
    %178 = arith.addf %177, %174 : vector<8x1xf32>
    %179 = arith.addf %135, %175 : vector<8x1xf32>
    %c4 = arith.constant 4 : index
    %c0_94 = arith.constant 0 : index
    %180 = vector.load %arg2[%c4, %c0_94] : memref<6x256xf32, #tpu.memory_space<vmem>>, vector<1x256xf32>
    %181 = vector.broadcast %178 : vector<8x1xf32> to vector<8x256xf32>
    %182 = vector.broadcast %180 : vector<1x256xf32> to vector<8x256xf32>
    %183 = arith.mulf %181, %182 : vector<8x256xf32>
    %c4_95 = arith.constant 4 : index
    %c0_96 = arith.constant 0 : index
    %184 = vector.load %arg3[%c4_95, %c0_96] : memref<6x256xf32, #tpu.memory_space<vmem>>, vector<1x256xf32>
    %185 = vector.broadcast %184 : vector<1x256xf32> to vector<8x256xf32>
    %186 = arith.addf %183, %185 : vector<8x256xf32>
    %cst_97 = arith.constant 0.000000e+00 : f32
    %187 = vector.broadcast %cst_97 : f32 to vector<8x256xf32>
    %188 = arith.cmpf oge, %186, %187 : vector<8x256xf32>
    %cst_98 = arith.constant 0.00999999977 : f32
    %189 = vector.broadcast %cst_98 : f32 to vector<8x256xf32>
    %190 = arith.mulf %189, %186 : vector<8x256xf32>
    %191 = arith.select %188, %186, %190 : vector<8x256xi1>, vector<8x256xf32>
    %c4_99 = arith.constant 4 : index
    %c0_100 = arith.constant 0 : index
    %c0_101 = arith.constant 0 : index
    %192 = vector.load %arg4[%c4_99, %c0_100, %c0_101] : memref<6x256x256xf32, #tpu.memory_space<vmem>>, vector<1x256x256xf32>
    %193 = vector.shape_cast %192 : vector<1x256x256xf32> to vector<256x256xf32>
    %cst_102 = arith.constant dense<0.000000e+00> : vector<8x256xf32>
    %194 = tpu.matmul %191, %193, %cst_102 {dimension_numbers = #tpu.dot_dimension_numbers<[1], [0], [0], [1], [0, 0, 1, 1], [], []>} : vector<8x256xf32>, vector<256x256xf32>, vector<8x256xf32> -> vector<8x256xf32>
    %c4_103 = arith.constant 4 : index
    %c0_104 = arith.constant 0 : index
    %195 = vector.load %arg5[%c4_103, %c0_104] : memref<6x256xf32, #tpu.memory_space<vmem>>, vector<1x256xf32>
    %196 = vector.broadcast %195 : vector<1x256xf32> to vector<8x256xf32>
    %197 = arith.addf %194, %196 : vector<8x256xf32>
    %cst_105 = arith.constant 0.000000e+00 : f32
    %198 = vector.broadcast %cst_105 : f32 to vector<8x256xf32>
    %199 = arith.cmpf oge, %197, %198 : vector<8x256xf32>
    %cst_106 = arith.constant 0.00999999977 : f32
    %200 = vector.broadcast %cst_106 : f32 to vector<8x256xf32>
    %201 = arith.mulf %200, %197 : vector<8x256xf32>
    %202 = arith.select %199, %197, %201 : vector<8x256xi1>, vector<8x256xf32>
    %c4_107 = arith.constant 4 : index
    %c0_108 = arith.constant 0 : index
    %203 = vector.load %arg6[%c4_107, %c0_108] : memref<6x256xf32, #tpu.memory_space<vmem>>, vector<1x256xf32>
    %204 = vector.broadcast %203 : vector<1x256xf32> to vector<8x256xf32>
    %205 = arith.mulf %202, %204 : vector<8x256xf32>
    %cst_109 = arith.constant dense<0.000000e+00> : vector<8xf32>
    %206 = vector.multi_reduction <add>, %205, %cst_109 [1] : vector<8x256xf32> to vector<8xf32>
    %207 = vector.shape_cast %206 : vector<8xf32> to vector<8x1xf32>
    %c4_110 = arith.constant 4 : index
    %c0_111 = arith.constant 0 : index
    %208 = memref.load %arg8[%c4_110, %c0_111] : memref<6x2xf32, #tpu.memory_space<smem>>
    %209 = vector.broadcast %208 : f32 to vector<8x1xf32>
    %210 = arith.addf %207, %209 : vector<8x1xf32>
    %c4_112 = arith.constant 4 : index
    %c0_113 = arith.constant 0 : index
    %211 = vector.load %arg7[%c4_112, %c0_113] : memref<6x256xf32, #tpu.memory_space<vmem>>, vector<1x256xf32>
    %212 = vector.broadcast %211 : vector<1x256xf32> to vector<8x256xf32>
    %213 = arith.mulf %202, %212 : vector<8x256xf32>
    %cst_114 = arith.constant dense<0.000000e+00> : vector<8xf32>
    %214 = vector.multi_reduction <add>, %213, %cst_114 [1] : vector<8x256xf32> to vector<8xf32>
    %215 = vector.shape_cast %214 : vector<8xf32> to vector<8x1xf32>
    %c4_115 = arith.constant 4 : index
    %c1_116 = arith.constant 1 : index
    %216 = memref.load %arg8[%c4_115, %c1_116] : memref<6x2xf32, #tpu.memory_space<smem>>
    %217 = vector.broadcast %216 : f32 to vector<8x1xf32>
    %218 = arith.addf %215, %217 : vector<8x1xf32>
    %219 = math.tanh %210 : vector<8x1xf32>
    %220 = math.exp %219 : vector<8x1xf32>
    %221 = arith.mulf %134, %220 : vector<8x1xf32>
    %222 = arith.addf %221, %218 : vector<8x1xf32>
    %223 = arith.addf %179, %219 : vector<8x1xf32>
    %c5 = arith.constant 5 : index
    %c0_117 = arith.constant 0 : index
    %224 = vector.load %arg2[%c5, %c0_117] : memref<6x256xf32, #tpu.memory_space<vmem>>, vector<1x256xf32>
    %225 = vector.broadcast %222 : vector<8x1xf32> to vector<8x256xf32>
    %226 = vector.broadcast %224 : vector<1x256xf32> to vector<8x256xf32>
    %227 = arith.mulf %225, %226 : vector<8x256xf32>
    %c5_118 = arith.constant 5 : index
    %c0_119 = arith.constant 0 : index
    %228 = vector.load %arg3[%c5_118, %c0_119] : memref<6x256xf32, #tpu.memory_space<vmem>>, vector<1x256xf32>
    %229 = vector.broadcast %228 : vector<1x256xf32> to vector<8x256xf32>
    %230 = arith.addf %227, %229 : vector<8x256xf32>
    %cst_120 = arith.constant 0.000000e+00 : f32
    %231 = vector.broadcast %cst_120 : f32 to vector<8x256xf32>
    %232 = arith.cmpf oge, %230, %231 : vector<8x256xf32>
    %cst_121 = arith.constant 0.00999999977 : f32
    %233 = vector.broadcast %cst_121 : f32 to vector<8x256xf32>
    %234 = arith.mulf %233, %230 : vector<8x256xf32>
    %235 = arith.select %232, %230, %234 : vector<8x256xi1>, vector<8x256xf32>
    %c5_122 = arith.constant 5 : index
    %c0_123 = arith.constant 0 : index
    %c0_124 = arith.constant 0 : index
    %236 = vector.load %arg4[%c5_122, %c0_123, %c0_124] : memref<6x256x256xf32, #tpu.memory_space<vmem>>, vector<1x256x256xf32>
    %237 = vector.shape_cast %236 : vector<1x256x256xf32> to vector<256x256xf32>
    %cst_125 = arith.constant dense<0.000000e+00> : vector<8x256xf32>
    %238 = tpu.matmul %235, %237, %cst_125 {dimension_numbers = #tpu.dot_dimension_numbers<[1], [0], [0], [1], [0, 0, 1, 1], [], []>} : vector<8x256xf32>, vector<256x256xf32>, vector<8x256xf32> -> vector<8x256xf32>
    %c5_126 = arith.constant 5 : index
    %c0_127 = arith.constant 0 : index
    %239 = vector.load %arg5[%c5_126, %c0_127] : memref<6x256xf32, #tpu.memory_space<vmem>>, vector<1x256xf32>
    %240 = vector.broadcast %239 : vector<1x256xf32> to vector<8x256xf32>
    %241 = arith.addf %238, %240 : vector<8x256xf32>
    %cst_128 = arith.constant 0.000000e+00 : f32
    %242 = vector.broadcast %cst_128 : f32 to vector<8x256xf32>
    %243 = arith.cmpf oge, %241, %242 : vector<8x256xf32>
    %cst_129 = arith.constant 0.00999999977 : f32
    %244 = vector.broadcast %cst_129 : f32 to vector<8x256xf32>
    %245 = arith.mulf %244, %241 : vector<8x256xf32>
    %246 = arith.select %243, %241, %245 : vector<8x256xi1>, vector<8x256xf32>
    %c5_130 = arith.constant 5 : index
    %c0_131 = arith.constant 0 : index
    %247 = vector.load %arg6[%c5_130, %c0_131] : memref<6x256xf32, #tpu.memory_space<vmem>>, vector<1x256xf32>
    %248 = vector.broadcast %247 : vector<1x256xf32> to vector<8x256xf32>
    %249 = arith.mulf %246, %248 : vector<8x256xf32>
    %cst_132 = arith.constant dense<0.000000e+00> : vector<8xf32>
    %250 = vector.multi_reduction <add>, %249, %cst_132 [1] : vector<8x256xf32> to vector<8xf32>
    %251 = vector.shape_cast %250 : vector<8xf32> to vector<8x1xf32>
    %c5_133 = arith.constant 5 : index
    %c0_134 = arith.constant 0 : index
    %252 = memref.load %arg8[%c5_133, %c0_134] : memref<6x2xf32, #tpu.memory_space<smem>>
    %253 = vector.broadcast %252 : f32 to vector<8x1xf32>
    %254 = arith.addf %251, %253 : vector<8x1xf32>
    %c5_135 = arith.constant 5 : index
    %c0_136 = arith.constant 0 : index
    %255 = vector.load %arg7[%c5_135, %c0_136] : memref<6x256xf32, #tpu.memory_space<vmem>>, vector<1x256xf32>
    %256 = vector.broadcast %255 : vector<1x256xf32> to vector<8x256xf32>
    %257 = arith.mulf %246, %256 : vector<8x256xf32>
    %cst_137 = arith.constant dense<0.000000e+00> : vector<8xf32>
    %258 = vector.multi_reduction <add>, %257, %cst_137 [1] : vector<8x256xf32> to vector<8xf32>
    %259 = vector.shape_cast %258 : vector<8xf32> to vector<8x1xf32>
    %c5_138 = arith.constant 5 : index
    %c1_139 = arith.constant 1 : index
    %260 = memref.load %arg8[%c5_138, %c1_139] : memref<6x2xf32, #tpu.memory_space<smem>>
    %261 = vector.broadcast %260 : f32 to vector<8x1xf32>
    %262 = arith.addf %259, %261 : vector<8x1xf32>
    %263 = math.tanh %254 : vector<8x1xf32>
    %264 = math.exp %263 : vector<8x1xf32>
    %265 = arith.mulf %178, %264 : vector<8x1xf32>
    %266 = arith.addf %265, %262 : vector<8x1xf32>
    %267 = arith.addf %223, %263 : vector<8x1xf32>
    %268 = tpu.iota {dimensions = array<i32: 1>} : vector<8x128xi32>
    %c0_i32 = arith.constant 0 : i32
    %269 = vector.broadcast %c0_i32 : i32 to vector<8x128xi32>
    %270 = arith.cmpi eq, %268, %269 : vector<8x128xi32>
    %c1_i32 = arith.constant 1 : i32
    %271 = vector.broadcast %c1_i32 : i32 to vector<8x128xi32>
    %272 = arith.cmpi eq, %268, %271 : vector<8x128xi32>
    %c2_i32 = arith.constant 2 : i32
    %273 = vector.broadcast %c2_i32 : i32 to vector<8x128xi32>
    %274 = arith.cmpi eq, %268, %273 : vector<8x128xi32>
    %cst_140 = arith.constant 0.000000e+00 : f32
    %275 = vector.shape_cast %267 : vector<8x1xf32> to vector<8x1xf32>
    %276 = vector.broadcast %275 : vector<8x1xf32> to vector<8x128xf32>
    %277 = vector.broadcast %cst_140 : f32 to vector<8x128xf32>
    %278 = arith.select %274, %276, %277 : vector<8x128xi1>, vector<8x128xf32>
    %279 = vector.shape_cast %266 : vector<8x1xf32> to vector<8x1xf32>
    %280 = vector.broadcast %279 : vector<8x1xf32> to vector<8x128xf32>
    %281 = arith.select %272, %280, %278 : vector<8x128xi1>, vector<8x128xf32>
    %282 = vector.shape_cast %222 : vector<8x1xf32> to vector<8x1xf32>
    %283 = vector.broadcast %282 : vector<8x1xf32> to vector<8x128xf32>
    %284 = arith.select %270, %283, %281 : vector<8x128xi1>, vector<8x128xf32>
    %c0_141 = arith.constant 0 : index
    %c0_142 = arith.constant 0 : index
    %285 = vector.load %arg9[%c0_141, %c0_142] : memref<8x128xf32, #tpu.memory_space<vmem>>, vector<8x128xf32>
    tpu.vector_store %arg9[%c0_141, %c0_142], %284 {strides = array<i32>} : memref<8x128xf32, #tpu.memory_space<vmem>>, vector<8x128xf32>,
    return
  }
  func.func @transform_0(%arg0: i32) -> (i32, i32) {
    %c0_i32 = arith.constant 0 : i32
    %c0_i32_0 = arith.constant 0 : i32
    return %arg0, %c0_i32 : i32, i32
  }
  func.func @transform_1(%arg0: i32) -> (i32, i32) {
    %c0_i32 = arith.constant 0 : i32
    %c0_i32_0 = arith.constant 0 : i32
    %c0_i32_1 = arith.constant 0 : i32
    return %c0_i32, %c0_i32_0 : i32, i32
  }
  func.func @transform_2(%arg0: i32) -> (i32, i32) {
    %c0_i32 = arith.constant 0 : i32
    %c0_i32_0 = arith.constant 0 : i32
    %c0_i32_1 = arith.constant 0 : i32
    return %c0_i32, %c0_i32_0 : i32, i32
  }
  func.func @transform_3(%arg0: i32) -> (i32, i32, i32) {
    %c0_i32 = arith.constant 0 : i32
    %c0_i32_0 = arith.constant 0 : i32
    %c0_i32_1 = arith.constant 0 : i32
    %c0_i32_2 = arith.constant 0 : i32
    return %c0_i32, %c0_i32_0, %c0_i32_1 : i32, i32, i32
  }
  func.func @transform_4(%arg0: i32) -> (i32, i32) {
    %c0_i32 = arith.constant 0 : i32
    %c0_i32_0 = arith.constant 0 : i32
    %c0_i32_1 = arith.constant 0 : i32
    return %c0_i32, %c0_i32_0 : i32, i32
  }
  func.func @transform_5(%arg0: i32) -> (i32, i32) {
    %c0_i32 = arith.constant 0 : i32
    %c0_i32_0 = arith.constant 0 : i32
    %c0_i32_1 = arith.constant 0 : i32
    return %c0_i32, %c0_i32_0 : i32, i32
  }
  func.func @transform_6(%arg0: i32) -> (i32, i32) {
    %c0_i32 = arith.constant 0 : i32
    %c0_i32_0 = arith.constant 0 : i32
    %c0_i32_1 = arith.constant 0 : i32
    return %c0_i32, %c0_i32_0 : i32, i32
  }
  func.func @transform_7(%arg0: i32) -> (i32, i32) {
    %c0_i32 = arith.constant 0 : i32
    %c0_i32_0 = arith.constant 0 : i32
    %c0_i32_1 = arith.constant 0 : i32
    return %c0_i32, %c0_i32_0 : i32, i32
  }
  func.func @transform_8(%arg0: i32) -> (i32, i32) {
    %c0_i32 = arith.constant 0 : i32
    %c0_i32_0 = arith.constant 0 : i32
    return %arg0, %c0_i32 : i32, i32
  }
}

</mosaic_0001>

<llo_original>
// kernel: _realnvp_forward.1
$region0: #{_realnvp_forward.1}
  #allocation0 [shape = 'u32[]', space=smem, size = 0x4, offset = 0x4, fixed_abs, tag = 'smem constant byte address 0x4 - core index']
  #allocation1 [shape = 'u32[144,128]{1,0:T(1,128)}', space=vmem, size = 0x12000, scoped, tag = 'internal scratch']
  %s0 = inlined_call_operand.vmem [shape: f32[8,2], index: 0, kind: input, shape index: {}]
  %s1 = inlined_call_operand.vmem [shape: f32[6,256], index: 1, kind: input, shape index: {}]
  %s2 = inlined_call_operand.hbm [shape: f32[6,256], index: 2, kind: input, shape index: {}]
  %s3 = inlined_call_operand.hbm [shape: f32[6,256,256], index: 3, kind: input, shape index: {}]
  %s4 = inlined_call_operand.hbm [shape: f32[6,256], index: 4, kind: input, shape index: {}]
  %s5 = inlined_call_operand.vmem [shape: f32[6,256], index: 5, kind: input, shape index: {}]
  %s6 = inlined_call_operand.vmem [shape: f32[6,256], index: 6, kind: input, shape index: {}]
  %s7 = inlined_call_operand.vmem [shape: f32[6,2], index: 7, kind: input, shape index: {}]
  %s8 = inlined_call_operand.vmem [shape: f32[8,128], index: 8, kind: output, shape index: {}]
  %s9 = sld [smem:[#allocation0]]
  $region58: #{_realnvp_forward.1} parent=0
    _
  %s11 = ssub.s32 1, %s9
  %s12 = scalar_select 0, %s11, %s9
  $region1: #{_realnvp_forward.1} parent=0
    #allocation2 [shape = 'u8[8192]{0}', space=vmem, size = 0x2000, scoped, tag = 'input window, operand 2, single buffered']
    #allocation3 [shape = 's32[1]{0}', space=sflag, size = 0x4, scoped, tag = 'scoped memory for _realnvp_forward.1']
    #allocation4 [shape = 's32[1]{0}', space=sflag, size = 0x4, scoped, tag = 'scoped memory for _realnvp_forward.1']
    #allocation5 [shape = 'u8[1572864]{0}', space=vmem, size = 0x180000, scoped, tag = 'input window, operand 3, single buffered']
    #allocation6 [shape = 's32[1]{0}', space=sflag, size = 0x4, scoped, tag = 'scoped memory for _realnvp_forward.1']
    #allocation7 [shape = 'u8[8192]{0}', space=vmem, size = 0x2000, scoped, tag = 'input window, operand 4, single buffered']
    #allocation8 [shape = 'u8[4096]{0}', space=smem, size = 0x1000, scoped, tag = 'input window, operand 7, single buffered']
    %13 = vsyncpa [#allocation3], 0
    %14 = vsyncpa [#allocation6], 0
    %15 = vsyncpa [#allocation4], 0
    // Predicated region
    $region2: #{_realnvp_forward.1} parent=1 // pred_check
      _
    $region3: #{_realnvp_forward.1} parent=1 // pred_check_branch
      %17 = sbr.rel (0) target = $region5
    $region4: #{_realnvp_forward.1} parent=1 // pred_region
      _
    $region5: #{_realnvp_forward.1} parent=1 // pred_fallthru
      _
    // Predicated region
    $region6: #{_realnvp_forward.1} parent=1 // pred_check
      _
    $region7: #{_realnvp_forward.1} parent=1 // pred_check_branch
      %19 = sbr.rel (0) target = $region9
    $region8: #{_realnvp_forward.1} parent=1 // pred_region
      _
    $region9: #{_realnvp_forward.1} parent=1 // pred_fallthru
      _
    // Predicated region
    $region10: #{_realnvp_forward.1} parent=1 // pred_check
      _
    $region11: #{_realnvp_forward.1} parent=1 // pred_check_branch
      %21 = sbr.rel (0) target = $region13
    $region12: #{_realnvp_forward.1} parent=1 // pred_region
      %s23 = ssub.s32 256, 256
      %24 = vsyncadd [#allocation3], %s23
      %s26 = sshll.u32 [#allocation2], 4
      %s27 = int_to_ptr.vmem [resolvable:$true] %s26
      %29 = dma.hbm_to_vmem [thread:$0]  %s2, 256, %s27, [#allocation3]
    $region13: #{_realnvp_forward.1} parent=1 // pred_fallthru
      _
    // Predicated region
    $region14: #{_realnvp_forward.1} parent=1 // pred_check
      _
    $region15: #{_realnvp_forward.1} parent=1 // pred_check_branch
      %31 = sbr.rel (0) target = $region17
    $region16: #{_realnvp_forward.1} parent=1 // pred_region
      %s33 = ssub.s32 49152, 49152
      %34 = vsyncadd [#allocation6], %s33
      %s35 = sshll.u32 [#allocation5], 4
      %s36 = int_to_ptr.vmem [resolvable:$true] %s35
      %41 = dma.hbm_to_vmem [thread:$0]  %s3, 49152, %s36, [#allocation6], 256, 256, 16
    $region17: #{_realnvp_forward.1} parent=1 // pred_fallthru
      _
    // Predicated region
    $region18: #{_realnvp_forward.1} parent=1 // pred_check
      _
    $region19: #{_realnvp_forward.1} parent=1 // pred_check_branch
      %43 = sbr.rel (0) target = $region21
    $region20: #{_realnvp_forward.1} parent=1 // pred_region
      %s45 = ssub.s32 256, 256
      %46 = vsyncadd [#allocation6], %s45
      %s48 = sshll.u32 [#allocation7], 4
      %s49 = int_to_ptr.vmem [resolvable:$true] %s48
      %51 = dma.hbm_to_vmem [thread:$0]  %s4, 256, %s49, [#allocation6]
    $region21: #{_realnvp_forward.1} parent=1 // pred_fallthru
      _
    // Predicated region
    $region22: #{_realnvp_forward.1} parent=1 // pred_check
      _
    $region23: #{_realnvp_forward.1} parent=1 // pred_check_branch
      %53 = sbr.rel (0) target = $region25
    $region24: #{_realnvp_forward.1} parent=1 // pred_region
      _
    $region25: #{_realnvp_forward.1} parent=1 // pred_fallthru
      _
    // Predicated region
    $region26: #{_realnvp_forward.1} parent=1 // pred_check
      _
    $region27: #{_realnvp_forward.1} parent=1 // pred_check_branch
      %55 = sbr.rel (0) target = $region29
    $region28: #{_realnvp_forward.1} parent=1 // pred_region
      _
    $region29: #{_realnvp_forward.1} parent=1 // pred_fallthru
      _
    // Predicated region
    $region30: #{_realnvp_forward.1} parent=1 // pred_check
      _
    $region31: #{_realnvp_forward.1} parent=1 // pred_check_branch
      %57 = sbr.rel (0) target = $region33
    $region32: #{_realnvp_forward.1} parent=1 // pred_region
      %s59 = ssub.s32 128, 128
      %60 = vsyncadd [#allocation4], %s59
      %s62 = sshll.u32 %s7, 4
      %s63 = int_to_ptr.vmem [resolvable:$true] %s62
      %65 = dma.vmem_to_smem %s63, 128, [#allocation8], [#allocation4]
    $region33: #{_realnvp_forward.1} parent=1 // pred_fallthru
      _
    // Predicated region
    $region34: #{_realnvp_forward.1} parent=1 // pred_check
      _
    $region35: #{_realnvp_forward.1} parent=1 // pred_check_branch
      %67 = sbr.rel (0) target = $region37
    $region36: #{_realnvp_forward.1} parent=1 // pred_region
      %68 = dma.done [#allocation3], 256
    $region37: #{_realnvp_forward.1} parent=1 // pred_fallthru
      _
    // Predicated region
    $region38: #{_realnvp_forward.1} parent=1 // pred_check
      _
    $region39: #{_realnvp_forward.1} parent=1 // pred_check_branch
      %70 = sbr.rel (0) target = $region41
    $region40: #{_realnvp_forward.1} parent=1 // pred_region
      %71 = dma.done [#allocation6], 49152
    $region41: #{_realnvp_forward.1} parent=1 // pred_fallthru
      _
    // Predicated region
    $region42: #{_realnvp_forward.1} parent=1 // pred_check
      _
    $region43: #{_realnvp_forward.1} parent=1 // pred_check_branch
      %73 = sbr.rel (0) target = $region45
    $region44: #{_realnvp_forward.1} parent=1 // pred_region
      %74 = dma.done [#allocation6], 256
    $region45: #{_realnvp_forward.1} parent=1 // pred_fallthru
      _
    // Predicated region
    $region46: #{_realnvp_forward.1} parent=1 // pred_check
      _
    $region47: #{_realnvp_forward.1} parent=1 // pred_check_branch
      %76 = sbr.rel (0) target = $region49
    $region48: #{_realnvp_forward.1} parent=1 // pred_region
      %77 = dma.done [#allocation4], 128
    $region49: #{_realnvp_forward.1} parent=1 // pred_fallthru
      _
    %78 = sfence
    %v79 = vld [vmem:[%s0] sm:$0xff]
    %v80 = vld [vmem:[%s1] ss:$8 sm:$0x3]
    %82 = vset.pattern.permute.xlu0 1
    %83 = vperm.xlu0 %82, %v79
    %v84 = vpop.permute.xlu0 %83
    %v87 = vlaneseq
    %v88 = vshrl.u32 %v87, 7
    %v89 = vsub.s32 0, %v88
    %v90 = vrot.slane %v80, %v89
    %v91 = vlaneseq
    %v92 = vshrl.u32 %v91, 7
    %v93 = vsub.s32 1, %v92
    %v94 = vrot.slane %v80, %v93
    %v97 = vmul.f32 %v84, %v90
    %v98 = vmul.f32 %v84, %v94
    %v99 = vld [vmem:[#allocation2] ss:$8 sm:$0x3]
    %v101 = vlaneseq
    %v102 = vshrl.u32 %v101, 7
    %v103 = vsub.s32 0, %v102
    %v104 = vrot.slane %v99, %v103
    %v105 = vlaneseq
    %v106 = vshrl.u32 %v105, 7
    %v107 = vsub.s32 1, %v106
    %v108 = vrot.slane %v99, %v107
    %v111 = vadd.f32 %v97, %v104
    %v112 = vadd.f32 %v98, %v108
    %vm113 = vcmp.ge.f32.partialorder %v111, 0.0
    %vm114 = vcmp.ge.f32.partialorder %v112, 0.0
    %v115 = vmul.f32 %v111, 0.01
    %v116 = vmul.f32 %v112, 0.01
    %v117 = vsel %vm113, %v111, %v115
    %v118 = vsel %vm114, %v112, %v116
    %v119 = vld [vmem:[#allocation5] sm:$0xff]
    %v120 = vld [vmem:[#allocation5 + $0x8] sm:$0xff]
    %v121 = vld [vmem:[#allocation5 + $0x10] sm:$0xff]
    %v122 = vld [vmem:[#allocation5 + $0x18] sm:$0xff]
    %v123 = vld [vmem:[#allocation5 + $0x20] sm:$0xff]
    %v124 = vld [vmem:[#allocation5 + $0x28] sm:$0xff]
    %v125 = vld [vmem:[#allocation5 + $0x30] sm:$0xff]
    %v126 = vld [vmem:[#allocation5 + $0x38] sm:$0xff]
    %v127 = vld [vmem:[#allocation5 + $0x40] sm:$0xff]
    %v128 = vld [vmem:[#allocation5 + $0x48] sm:$0xff]
    %v129 = vld [vmem:[#allocation5 + $0x50] sm:$0xff]
    %v130 = vld [vmem:[#allocation5 + $0x58] sm:$0xff]
    %v131 = vld [vmem:[#allocation5 + $0x60] sm:$0xff]
    %v132 = vld [vmem:[#allocation5 + $0x68] sm:$0xff]
    %v133 = vld [vmem:[#allocation5 + $0x70] sm:$0xff]
    %v134 = vld [vmem:[#allocation5 + $0x78] sm:$0xff]
    %v135 = vld [vmem:[#allocation5 + $0x80] sm:$0xff]
    %v136 = vld [vmem:[#allocation5 + $0x88] sm:$0xff]
    %v137 = vld [vmem:[#allocation5 + $0x90] sm:$0xff]
    %v138 = vld [vmem:[#allocation5 + $0x98] sm:$0xff]
    %v139 = vld [vmem:[#allocation5 + $0xa0] sm:$0xff]
    %v140 = vld [vmem:[#allocation5 + $0xa8] sm:$0xff]
    %v141 = vld [vmem:[#allocation5 + $0xb0] sm:$0xff]
    %v142 = vld [vmem:[#allocation5 + $0xb8] sm:$0xff]
    %v143 = vld [vmem:[#allocation5 + $0xc0] sm:$0xff]
    %v144 = vld [vmem:[#allocation5 + $0xc8] sm:$0xff]
    %v145 = vld [vmem:[#allocation5 + $0xd0] sm:$0xff]
    %v146 = vld [vmem:[#allocation5 + $0xd8] sm:$0xff]
    %v147 = vld [vmem:[#allocation5 + $0xe0] sm:$0xff]
    %v148 = vld [vmem:[#allocation5 + $0xe8] sm:$0xff]
    %v149 = vld [vmem:[#allocation5 + $0xf0] sm:$0xff]
    %v150 = vld [vmem:[#allocation5 + $0xf8] sm:$0xff]
    %v151 = vld [vmem:[#allocation5 + $0x100] sm:$0xff]
    %v152 = vld [vmem:[#allocation5 + $0x108] sm:$0xff]
    %v153 = vld [vmem:[#allocation5 + $0x110] sm:$0xff]
    %v154 = vld [vmem:[#allocation5 + $0x118] sm:$0xff]
    %v155 = vld [vmem:[#allocation5 + $0x120] sm:$0xff]
    %v156 = vld [vmem:[#allocation5 + $0x128] sm:$0xff]
    %v157 = vld [vmem:[#allocation5 + $0x130] sm:$0xff]
    %v158 = vld [vmem:[#allocation5 + $0x138] sm:$0xff]
    %v159 = vld [vmem:[#allocation5 + $0x140] sm:$0xff]
    %v160 = vld [vmem:[#allocation5 + $0x148] sm:$0xff]
    %v161 = vld [vmem:[#allocation5 + $0x150] sm:$0xff]
    %v162 = vld [vmem:[#allocation5 + $0x158] sm:$0xff]
    %v163 = vld [vmem:[#allocation5 + $0x160] sm:$0xff]
    %v164 = vld [vmem:[#allocation5 + $0x168] sm:$0xff]
    %v165 = vld [vmem:[#allocation5 + $0x170] sm:$0xff]
    %v166 = vld [vmem:[#allocation5 + $0x178] sm:$0xff]
    %v167 = vld [vmem:[#allocation5 + $0x180] sm:$0xff]
    %v168 = vld [vmem:[#allocation5 + $0x188] sm:$0xff]
    %v169 = vld [vmem:[#allocation5 + $0x190] sm:$0xff]
    %v170 = vld [vmem:[#allocation5 + $0x198] sm:$0xff]
    %v171 = vld [vmem:[#allocation5 + $0x1a0] sm:$0xff]
    %v172 = vld [vmem:[#allocation5 + $0x1a8] sm:$0xff]
    %v173 = vld [vmem:[#allocation5 + $0x1b0] sm:$0xff]
    %v174 = vld [vmem:[#allocation5 + $0x1b8] sm:$0xff]
    %v175 = vld [vmem:[#allocation5 + $0x1c0] sm:$0xff]
    %v176 = vld [vmem:[#allocation5 + $0x1c8] sm:$0xff]
    %v177 = vld [vmem:[#allocation5 + $0x1d0] sm:$0xff]
    %v178 = vld [vmem:[#allocation5 + $0x1d8] sm:$0xff]
    %v179 = vld [vmem:[#allocation5 + $0x1e0] sm:$0xff]
    %v180 = vld [vmem:[#allocation5 + $0x1e8] sm:$0xff]
    %v181 = vld [vmem:[#allocation5 + $0x1f0] sm:$0xff]
    %v182 = vld [vmem:[#allocation5 + $0x1f8] sm:$0xff]
    %v183 = vld [vmem:[#allocation7] ss:$8 sm:$0x3]
    %v185 = vlaneseq
    %v186 = vshrl.u32 %v185, 7
    %v187 = vsub.s32 0, %v186
    %v188 = vrot.slane %v183, %v187
    %v189 = vlaneseq
    %v190 = vshrl.u32 %v189, 7
    %v191 = vsub.s32 1, %v190
    %v192 = vrot.slane %v183, %v191
    %195 = vmatprep.subr.mxu0 %v120
    %196 = vmatpush1.msra.mxu0 %v119
    %197 = vmatprep.subr.mxu0 %v122
    %198 = vmatpush1.msra.mxu0 %v121
    %199 = vmatprep.subr.mxu0 %v124
    %200 = vmatpush1.msra.mxu0 %v123
    %201 = vmatprep.subr.mxu0 %v126
    %202 = vmatpush1.msra.mxu0 %v125
    %203 = vmatprep.subr.mxu0 %v128
    %204 = vmatpush1.msra.mxu0 %v127
    %205 = vmatprep.subr.mxu0 %v130
    %206 = vmatpush1.msra.mxu0 %v129
    %207 = vmatprep.subr.mxu0 %v132
    %208 = vmatpush1.msra.mxu0 %v131
    %209 = vmatprep.subr.mxu0 %v134
    %210 = vmatpush1.msra.mxu0 %v133
    %211 = vmatprep.subr.mxu0 %v136
    %212 = vmatpush1.msra.mxu0 %v135
    %213 = vmatprep.subr.mxu0 %v138
    %214 = vmatpush1.msra.mxu0 %v137
    %215 = vmatprep.subr.mxu0 %v140
    %216 = vmatpush1.msra.mxu0 %v139
    %217 = vmatprep.subr.mxu0 %v142
    %218 = vmatpush1.msra.mxu0 %v141
    %219 = vmatprep.subr.mxu0 %v144
    %220 = vmatpush1.msra.mxu0 %v143
    %221 = vmatprep.subr.mxu0 %v146
    %222 = vmatpush1.msra.mxu0 %v145
    %223 = vmatprep.subr.mxu0 %v148
    %224 = vmatpush1.msra.mxu0 %v147
    %225 = vmatprep.subr.mxu0 %v150
    %226 = vmatpush1.msra.mxu0 %v149
    %227 = vmatprep.subr.mxu0 %v152
    %228 = vmatpush1.msra.mxu0 %v151
    %229 = vmatprep.subr.mxu0 %v154
    %230 = vmatpush1.msra.mxu0 %v153
    %231 = vmatprep.subr.mxu0 %v156
    %232 = vmatpush1.msra.mxu0 %v155
    %233 = vmatprep.subr.mxu0 %v158
    %234 = vmatpush1.msra.mxu0 %v157
    %235 = vmatprep.subr.mxu0 %v160
    %236 = vmatpush1.msra.mxu0 %v159
    %237 = vmatprep.subr.mxu0 %v162
    %238 = vmatpush1.msra.mxu0 %v161
    %239 = vmatprep.subr.mxu0 %v164
    %240 = vmatpush1.msra.mxu0 %v163
    %241 = vmatprep.subr.mxu0 %v166
    %242 = vmatpush1.msra.mxu0 %v165
    %243 = vmatprep.subr.mxu0 %v168
    %244 = vmatpush1.msra.mxu0 %v167
    %245 = vmatprep.subr.mxu0 %v170
    %246 = vmatpush1.msra.mxu0 %v169
    %247 = vmatprep.subr.mxu0 %v172
    %248 = vmatpush1.msra.mxu0 %v171
    %249 = vmatprep.subr.mxu0 %v174
    %250 = vmatpush1.msra.mxu0 %v173
    %251 = vmatprep.subr.mxu0 %v176
    %252 = vmatpush1.msra.mxu0 %v175
    %253 = vmatprep.subr.mxu0 %v178
    %254 = vmatpush1.msra.mxu0 %v177
    %255 = vmatprep.subr.mxu0 %v180
    %256 = vmatpush1.msra.mxu0 %v179
    %257 = vmatprep.subr.mxu0 %v182
    %258 = vmatpush1.msra.mxu0 %v181
    %259 = vmatprep.mubr.f32.mxu0 %v118
    %260 = vmatmul.mubr.f32.gmra.mrb[0].mxu0 %v117
    %v261 = vpop.f32.mrb[0].mxu0
    %v262 = vadd.f32 %v188, %v261
    %v263 = vpop.f32.mrb[0].mxu0
    %v264 = vadd.f32 %v192, %v263
    %265 = vdwg.mxu0
    %vm266 = vcmp.ge.f32.partialorder %v262, 0.0
    %vm267 = vcmp.ge.f32.partialorder %v264, 0.0
    %v268 = vmul.f32 %v262, 0.01
    %v269 = vmul.f32 %v264, 0.01
    %v270 = vsel %vm266, %v262, %v268
    %v271 = vsel %vm267, %v264, %v269
    %v272 = vld [vmem:[%s5] ss:$8 sm:$0x3]
    %v274 = vlaneseq
    %v275 = vshrl.u32 %v274, 7
    %v276 = vsub.s32 0, %v275
    %v277 = vrot.slane %v272, %v276
    %v278 = vlaneseq
    %v279 = vshrl.u32 %v278, 7
    %v280 = vsub.s32 1, %v279
    %v281 = vrot.slane %v272, %v280
    %v284 = vmul.f32 %v270, %v277
    %v285 = vmul.f32 %v271, %v281
    %v286 = vadd.f32 %v284, %v285
    %287 = vadd.xlane.f32.xlu0 %v286
    %v288 = vpop.xlane.xlu0 %287
    %s289 = sld [smem:[#allocation8]]
    %v290 = vstv %s289
    %v291 = vadd.f32 %v288, %v290
    %v292 = vld [vmem:[%s6] ss:$8 sm:$0x3]
    %v294 = vlaneseq
    %v295 = vshrl.u32 %v294, 7
    %v296 = vsub.s32 0, %v295
    %v297 = vrot.slane %v292, %v296
    %v298 = vlaneseq
    %v299 = vshrl.u32 %v298, 7
    %v300 = vsub.s32 1, %v299
    %v301 = vrot.slane %v292, %v300
    %v304 = vmul.f32 %v270, %v297
    %v305 = vmul.f32 %v271, %v301
    %v306 = vadd.f32 %v304, %v305
    %307 = vadd.xlane.f32.xlu0 %v306
    %v308 = vpop.xlane.xlu0 %307
    %s309 = sld [smem:[#allocation8 + $0x1]]
    %v310 = vstv %s309
    %v311 = vadd.f32 %v308, %v310
    %v312 = vtanh.pop %v291
    %v313 = vmul.f32 %v312, 1.442695
    %v314 = vpow.pop %v313
    %v315 = vmul.f32 %v79, %v314
    %v316 = vadd.f32 %v315, %v311
    %v317 = vadd.f32 %v312, 0.0
    %s318 = scalar_lea.vmem %s1, 1
    %v319 = vld [vmem:[%s318] ss:$8 sm:$0x3]
    %321 = vset.pattern.permute.xlu0 0
    %322 = vperm.xlu0 %321, %v316
    %v323 = vpop.permute.xlu0 %322
    %v326 = vlaneseq
    %v327 = vshrl.u32 %v326, 7
    %v328 = vsub.s32 0, %v327
    %v329 = vrot.slane %v319, %v328
    %v330 = vlaneseq
    %v331 = vshrl.u32 %v330, 7
    %v332 = vsub.s32 1, %v331
    %v333 = vrot.slane %v319, %v332
    %v336 = vmul.f32 %v323, %v329
    %v337 = vmul.f32 %v323, %v333
    %s338 = scalar_lea.vmem [#allocation2], 1
    %v339 = vld [vmem:[%s338] ss:$8 sm:$0x3]
    %v341 = vlaneseq
    %v342 = vshrl.u32 %v341, 7
    %v343 = vsub.s32 0, %v342
    %v344 = vrot.slane %v339, %v343
    %v345 = vlaneseq
    %v346 = vshrl.u32 %v345, 7
    %v347 = vsub.s32 1, %v346
    %v348 = vrot.slane %v339, %v347
    %v351 = vadd.f32 %v336, %v344
    %v352 = vadd.f32 %v337, %v348
    %vm353 = vcmp.ge.f32.partialorder %v351, 0.0
    %vm354 = vcmp.ge.f32.partialorder %v352, 0.0
    %v355 = vmul.f32 %v351, 0.01
    %v356 = vmul.f32 %v352, 0.01
    %v357 = vsel %vm353, %v351, %v355
    %v358 = vsel %vm354, %v352, %v356
    %s359 = scalar_lea.vmem [#allocation5], 512
    %v360 = vld [vmem:[%s359] sm:$0xff]
    %v361 = vld [vmem:[%s359 + $0x8] sm:$0xff]
    %v362 = vld [vmem:[%s359 + $0x10] sm:$0xff]
    %v363 = vld [vmem:[%s359 + $0x18] sm:$0xff]
    %v364 = vld [vmem:[%s359 + $0x20] sm:$0xff]
    %v365 = vld [vmem:[%s359 + $0x28] sm:$0xff]
    %v366 = vld [vmem:[%s359 + $0x30] sm:$0xff]
    %v367 = vld [vmem:[%s359 + $0x38] sm:$0xff]
    %v368 = vld [vmem:[%s359 + $0x40] sm:$0xff]
    %v369 = vld [vmem:[%s359 + $0x48] sm:$0xff]
    %v370 = vld [vmem:[%s359 + $0x50] sm:$0xff]
    %v371 = vld [vmem:[%s359 + $0x58] sm:$0xff]
    %v372 = vld [vmem:[%s359 + $0x60] sm:$0xff]
    %v373 = vld [vmem:[%s359 + $0x68] sm:$0xff]
    %v374 = vld [vmem:[%s359 + $0x70] sm:$0xff]
    %v375 = vld [vmem:[%s359 + $0x78] sm:$0xff]
    %v376 = vld [vmem:[%s359 + $0x80] sm:$0xff]
    %v377 = vld [vmem:[%s359 + $0x88] sm:$0xff]
    %v378 = vld [vmem:[%s359 + $0x90] sm:$0xff]
    %v379 = vld [vmem:[%s359 + $0x98] sm:$0xff]
    %v380 = vld [vmem:[%s359 + $0xa0] sm:$0xff]
    %v381 = vld [vmem:[%s359 + $0xa8] sm:$0xff]
    %v382 = vld [vmem:[%s359 + $0xb0] sm:$0xff]
    %v383 = vld [vmem:[%s359 + $0xb8] sm:$0xff]
    %v384 = vld [vmem:[%s359 + $0xc0] sm:$0xff]
    %v385 = vld [vmem:[%s359 + $0xc8] sm:$0xff]
    %v386 = vld [vmem:[%s359 + $0xd0] sm:$0xff]
    %v387 = vld [vmem:[%s359 + $0xd8] sm:$0xff]
    %v388 = vld [vmem:[%s359 + $0xe0] sm:$0xff]
    %v389 = vld [vmem:[%s359 + $0xe8] sm:$0xff]
    %v390 = vld [vmem:[%s359 + $0xf0] sm:$0xff]
    %v391 = vld [vmem:[%s359 + $0xf8] sm:$0xff]
    %v392 = vld [vmem:[%s359 + $0x100] sm:$0xff]
    %v393 = vld [vmem:[%s359 + $0x108] sm:$0xff]
    %v394 = vld [vmem:[%s359 + $0x110] sm:$0xff]
    %v395 = vld [vmem:[%s359 + $0x118] sm:$0xff]
    %v396 = vld [vmem:[%s359 + $0x120] sm:$0xff]
    %v397 = vld [vmem:[%s359 + $0x128] sm:$0xff]
    %v398 = vld [vmem:[%s359 + $0x130] sm:$0xff]
    %v399 = vld [vmem:[%s359 + $0x138] sm:$0xff]
    %v400 = vld [vmem:[%s359 + $0x140] sm:$0xff]
    %v401 = vld [vmem:[%s359 + $0x148] sm:$0xff]
    %v402 = vld [vmem:[%s359 + $0x150] sm:$0xff]
    %v403 = vld [vmem:[%s359 + $0x158] sm:$0xff]
    %v404 = vld [vmem:[%s359 + $0x160] sm:$0xff]
    %v405 = vld [vmem:[%s359 + $0x168] sm:$0xff]
    %v406 = vld [vmem:[%s359 + $0x170] sm:$0xff]
    %v407 = vld [vmem:[%s359 + $0x178] sm:$0xff]
    %v408 = vld [vmem:[%s359 + $0x180] sm:$0xff]
    %v409 = vld [vmem:[%s359 + $0x188] sm:$0xff]
    %v410 = vld [vmem:[%s359 + $0x190] sm:$0xff]
    %v411 = vld [vmem:[%s359 + $0x198] sm:$0xff]
    %v412 = vld [vmem:[%s359 + $0x1a0] sm:$0xff]
    %v413 = vld [vmem:[%s359 + $0x1a8] sm:$0xff]
    %v414 = vld [vmem:[%s359 + $0x1b0] sm:$0xff]
    %v415 = vld [vmem:[%s359 + $0x1b8] sm:$0xff]
    %v416 = vld [vmem:[%s359 + $0x1c0] sm:$0xff]
    %v417 = vld [vmem:[%s359 + $0x1c8] sm:$0xff]
    %v418 = vld [vmem:[%s359 + $0x1d0] sm:$0xff]
    %v419 = vld [vmem:[%s359 + $0x1d8] sm:$0xff]
    %v420 = vld [vmem:[%s359 + $0x1e0] sm:$0xff]
    %v421 = vld [vmem:[%s359 + $0x1e8] sm:$0xff]
    %v422 = vld [vmem:[%s359 + $0x1f0] sm:$0xff]
    %v423 = vld [vmem:[%s359 + $0x1f8] sm:$0xff]
    %s424 = scalar_lea.vmem [#allocation7], 1
    %v425 = vld [vmem:[%s424] ss:$8 sm:$0x3]
    %v427 = vlaneseq
    %v428 = vshrl.u32 %v427, 7
    %v429 = vsub.s32 0, %v428
    %v430 = vrot.slane %v425, %v429
    %v431 = vlaneseq
    %v432 = vshrl.u32 %v431, 7
    %v433 = vsub.s32 1, %v432
    %v434 = vrot.slane %v425, %v433
    %437 = vmatprep.subr.mxu0 %v361
    %438 = vmatpush1.msra.mxu0 %v360
    %439 = vmatprep.subr.mxu0 %v363
    %440 = vmatpush1.msra.mxu0 %v362
    %441 = vmatprep.subr.mxu0 %v365
    %442 = vmatpush1.msra.mxu0 %v364
    %443 = vmatprep.subr.mxu0 %v367
    %444 = vmatpush1.msra.mxu0 %v366
    %445 = vmatprep.subr.mxu0 %v369
    %446 = vmatpush1.msra.mxu0 %v368
    %447 = vmatprep.subr.mxu0 %v371
    %448 = vmatpush1.msra.mxu0 %v370
    %449 = vmatprep.subr.mxu0 %v373
    %450 = vmatpush1.msra.mxu0 %v372
    %451 = vmatprep.subr.mxu0 %v375
    %452 = vmatpush1.msra.mxu0 %v374
    %453 = vmatprep.subr.mxu0 %v377
    %454 = vmatpush1.msra.mxu0 %v376
    %455 = vmatprep.subr.mxu0 %v379
    %456 = vmatpush1.msra.mxu0 %v378
    %457 = vmatprep.subr.mxu0 %v381
    %458 = vmatpush1.msra.mxu0 %v380
    %459 = vmatprep.subr.mxu0 %v383
    %460 = vmatpush1.msra.mxu0 %v382
    %461 = vmatprep.subr.mxu0 %v385
    %462 = vmatpush1.msra.mxu0 %v384
    %463 = vmatprep.subr.mxu0 %v387
    %464 = vmatpush1.msra.mxu0 %v386
    %465 = vmatprep.subr.mxu0 %v389
    %466 = vmatpush1.msra.mxu0 %v388
    %467 = vmatprep.subr.mxu0 %v391
    %468 = vmatpush1.msra.mxu0 %v390
    %469 = vmatprep.subr.mxu0 %v393
    %470 = vmatpush1.msra.mxu0 %v392
    %471 = vmatprep.subr.mxu0 %v395
    %472 = vmatpush1.msra.mxu0 %v394
    %473 = vmatprep.subr.mxu0 %v397
    %474 = vmatpush1.msra.mxu0 %v396
    %475 = vmatprep.subr.mxu0 %v399
    %476 = vmatpush1.msra.mxu0 %v398
    %477 = vmatprep.subr.mxu0 %v401
    %478 = vmatpush1.msra.mxu0 %v400
    %479 = vmatprep.subr.mxu0 %v403
    %480 = vmatpush1.msra.mxu0 %v402
    %481 = vmatprep.subr.mxu0 %v405
    %482 = vmatpush1.msra.mxu0 %v404
    %483 = vmatprep.subr.mxu0 %v407
    %484 = vmatpush1.msra.mxu0 %v406
    %485 = vmatprep.subr.mxu0 %v409
    %486 = vmatpush1.msra.mxu0 %v408
    %487 = vmatprep.subr.mxu0 %v411
    %488 = vmatpush1.msra.mxu0 %v410
    %489 = vmatprep.subr.mxu0 %v413
    %490 = vmatpush1.msra.mxu0 %v412
    %491 = vmatprep.subr.mxu0 %v415
    %492 = vmatpush1.msra.mxu0 %v414
    %493 = vmatprep.subr.mxu0 %v417
    %494 = vmatpush1.msra.mxu0 %v416
    %495 = vmatprep.subr.mxu0 %v419
    %496 = vmatpush1.msra.mxu0 %v418
    %497 = vmatprep.subr.mxu0 %v421
    %498 = vmatpush1.msra.mxu0 %v420
    %499 = vmatprep.subr.mxu0 %v423
    %500 = vmatpush1.msra.mxu0 %v422
    %501 = vmatprep.mubr.f32.mxu0 %v358
    %502 = vmatmul.mubr.f32.gmra.mrb[0].mxu0 %v357
    %v503 = vpop.f32.mrb[0].mxu0
    %v504 = vadd.f32 %v430, %v503
    %v505 = vpop.f32.mrb[0].mxu0
    %v506 = vadd.f32 %v434, %v505
    %507 = vdwg.mxu0
    %vm508 = vcmp.ge.f32.partialorder %v504, 0.0
    %vm509 = vcmp.ge.f32.partialorder %v506, 0.0
    %v510 = vmul.f32 %v504, 0.01
    %v511 = vmul.f32 %v506, 0.01
    %v512 = vsel %vm508, %v504, %v510
    %v513 = vsel %vm509, %v506, %v511
    %s514 = scalar_lea.vmem %s5, 1
    %v515 = vld [vmem:[%s514] ss:$8 sm:$0x3]
    %v517 = vlaneseq
    %v518 = vshrl.u32 %v517, 7
    %v519 = vsub.s32 0, %v518
    %v520 = vrot.slane %v515, %v519
    %v521 = vlaneseq
    %v522 = vshrl.u32 %v521, 7
    %v523 = vsub.s32 1, %v522
    %v524 = vrot.slane %v515, %v523
    %v527 = vmul.f32 %v512, %v520
    %v528 = vmul.f32 %v513, %v524
    %v529 = vadd.f32 %v527, %v528
    %530 = vadd.xlane.f32.xlu0 %v529
    %v531 = vpop.xlane.xlu0 %530
    %s532 = sld [smem:[#allocation8 + $0x80]]
    %v533 = vstv %s532
    %v534 = vadd.f32 %v531, %v533
    %s535 = scalar_lea.vmem %s6, 1
    %v536 = vld [vmem:[%s535] ss:$8 sm:$0x3]
    %v538 = vlaneseq
    %v539 = vshrl.u32 %v538, 7
    %v540 = vsub.s32 0, %v539
    %v541 = vrot.slane %v536, %v540
    %v542 = vlaneseq
    %v543 = vshrl.u32 %v542, 7
    %v544 = vsub.s32 1, %v543
    %v545 = vrot.slane %v536, %v544
    %v548 = vmul.f32 %v512, %v541
    %v549 = vmul.f32 %v513, %v545
    %v550 = vadd.f32 %v548, %v549
    %551 = vadd.xlane.f32.xlu0 %v550
    %v552 = vpop.xlane.xlu0 %551
    %s553 = sld [smem:[#allocation8 + $0x81]]
    %v554 = vstv %s553
    %v555 = vadd.f32 %v552, %v554
    %v556 = vtanh.pop %v534
    %v557 = vmul.f32 %v556, 1.442695
    %v558 = vpow.pop %v557
    %v559 = vmul.f32 %v79, %v558
    %v560 = vadd.f32 %v559, %v555
    %v561 = vadd.f32 %v317, %v556
    %s562 = scalar_lea.vmem %s1, 2
    %v563 = vld [vmem:[%s562] ss:$8 sm:$0x3]
    %565 = vset.pattern.permute.xlu0 1
    %566 = vperm.xlu0 %565, %v560
    %v567 = vpop.permute.xlu0 %566
    %v570 = vlaneseq
    %v571 = vshrl.u32 %v570, 7
    %v572 = vsub.s32 0, %v571
    %v573 = vrot.slane %v563, %v572
    %v574 = vlaneseq
    %v575 = vshrl.u32 %v574, 7
    %v576 = vsub.s32 1, %v575
    %v577 = vrot.slane %v563, %v576
    %v580 = vmul.f32 %v567, %v573
    %v581 = vmul.f32 %v567, %v577
    %s582 = scalar_lea.vmem [#allocation2], 2
    %v583 = vld [vmem:[%s582] ss:$8 sm:$0x3]
    %v585 = vlaneseq
    %v586 = vshrl.u32 %v585, 7
    %v587 = vsub.s32 0, %v586
    %v588 = vrot.slane %v583, %v587
    %v589 = vlaneseq
    %v590 = vshrl.u32 %v589, 7
    %v591 = vsub.s32 1, %v590
    %v592 = vrot.slane %v583, %v591
    %v595 = vadd.f32 %v580, %v588
    %v596 = vadd.f32 %v581, %v592
    %vm597 = vcmp.ge.f32.partialorder %v595, 0.0
    %vm598 = vcmp.ge.f32.partialorder %v596, 0.0
    %v599 = vmul.f32 %v595, 0.01
    %v600 = vmul.f32 %v596, 0.01
    %v601 = vsel %vm597, %v595, %v599
    %v602 = vsel %vm598, %v596, %v600
    %s603 = scalar_lea.vmem [#allocation5], 1024
    %v604 = vld [vmem:[%s603] sm:$0xff]
    %v605 = vld [vmem:[%s603 + $0x8] sm:$0xff]
    %v606 = vld [vmem:[%s603 + $0x10] sm:$0xff]
    %v607 = vld [vmem:[%s603 + $0x18] sm:$0xff]
    %v608 = vld [vmem:[%s603 + $0x20] sm:$0xff]
    %v609 = vld [vmem:[%s603 + $0x28] sm:$0xff]
    %v610 = vld [vmem:[%s603 + $0x30] sm:$0xff]
    %v611 = vld [vmem:[%s603 + $0x38] sm:$0xff]
    %v612 = vld [vmem:[%s603 + $0x40] sm:$0xff]
    %v613 = vld [vmem:[%s603 + $0x48] sm:$0xff]
    %v614 = vld [vmem:[%s603 + $0x50] sm:$0xff]
    %v615 = vld [vmem:[%s603 + $0x58] sm:$0xff]
    %v616 = vld [vmem:[%s603 + $0x60] sm:$0xff]
    %v617 = vld [vmem:[%s603 + $0x68] sm:$0xff]
    %v618 = vld [vmem:[%s603 + $0x70] sm:$0xff]
    %v619 = vld [vmem:[%s603 + $0x78] sm:$0xff]
    %v620 = vld [vmem:[%s603 + $0x80] sm:$0xff]
    %v621 = vld [vmem:[%s603 + $0x88] sm:$0xff]
    %v622 = vld [vmem:[%s603 + $0x90] sm:$0xff]
    %v623 = vld [vmem:[%s603 + $0x98] sm:$0xff]
    %v624 = vld [vmem:[%s603 + $0xa0] sm:$0xff]
    %v625 = vld [vmem:[%s603 + $0xa8] sm:$0xff]
    %v626 = vld [vmem:[%s603 + $0xb0] sm:$0xff]
    %v627 = vld [vmem:[%s603 + $0xb8] sm:$0xff]
    %v628 = vld [vmem:[%s603 + $0xc0] sm:$0xff]
    %v629 = vld [vmem:[%s603 + $0xc8] sm:$0xff]
    %v630 = vld [vmem:[%s603 + $0xd0] sm:$0xff]
    %v631 = vld [vmem:[%s603 + $0xd8] sm:$0xff]
    %v632 = vld [vmem:[%s603 + $0xe0] sm:$0xff]
    %v633 = vld [vmem:[%s603 + $0xe8] sm:$0xff]
    %v634 = vld [vmem:[%s603 + $0xf0] sm:$0xff]
    %v635 = vld [vmem:[%s603 + $0xf8] sm:$0xff]
    %v636 = vld [vmem:[%s603 + $0x100] sm:$0xff]
    %v637 = vld [vmem:[%s603 + $0x108] sm:$0xff]
    %v638 = vld [vmem:[%s603 + $0x110] sm:$0xff]
    %v639 = vld [vmem:[%s603 + $0x118] sm:$0xff]
    %v640 = vld [vmem:[%s603 + $0x120] sm:$0xff]
    %v641 = vld [vmem:[%s603 + $0x128] sm:$0xff]
    %v642 = vld [vmem:[%s603 + $0x130] sm:$0xff]
    %v643 = vld [vmem:[%s603 + $0x138] sm:$0xff]
    %v644 = vld [vmem:[%s603 + $0x140] sm:$0xff]
    %v645 = vld [vmem:[%s603 + $0x148] sm:$0xff]
    %v646 = vld [vmem:[%s603 + $0x150] sm:$0xff]
    %v647 = vld [vmem:[%s603 + $0x158] sm:$0xff]
    %v648 = vld [vmem:[%s603 + $0x160] sm:$0xff]
    %v649 = vld [vmem:[%s603 + $0x168] sm:$0xff]
    %v650 = vld [vmem:[%s603 + $0x170] sm:$0xff]
    %v651 = vld [vmem:[%s603 + $0x178] sm:$0xff]
    %v652 = vld [vmem:[%s603 + $0x180] sm:$0xff]
    %v653 = vld [vmem:[%s603 + $0x188] sm:$0xff]
    %v654 = vld [vmem:[%s603 + $0x190] sm:$0xff]
    %v655 = vld [vmem:[%s603 + $0x198] sm:$0xff]
    %v656 = vld [vmem:[%s603 + $0x1a0] sm:$0xff]
    %v657 = vld [vmem:[%s603 + $0x1a8] sm:$0xff]
    %v658 = vld [vmem:[%s603 + $0x1b0] sm:$0xff]
    %v659 = vld [vmem:[%s603 + $0x1b8] sm:$0xff]
    %v660 = vld [vmem:[%s603 + $0x1c0] sm:$0xff]
    %v661 = vld [vmem:[%s603 + $0x1c8] sm:$0xff]
    %v662 = vld [vmem:[%s603 + $0x1d0] sm:$0xff]
    %v663 = vld [vmem:[%s603 + $0x1d8] sm:$0xff]
    %v664 = vld [vmem:[%s603 + $0x1e0] sm:$0xff]
    %v665 = vld [vmem:[%s603 + $0x1e8] sm:$0xff]
    %v666 = vld [vmem:[%s603 + $0x1f0] sm:$0xff]
    %v667 = vld [vmem:[%s603 + $0x1f8] sm:$0xff]
    %s668 = scalar_lea.vmem [#allocation7], 2
    %v669 = vld [vmem:[%s668] ss:$8 sm:$0x3]
    %v671 = vlaneseq
    %v672 = vshrl.u32 %v671, 7
    %v673 = vsub.s32 0, %v672
    %v674 = vrot.slane %v669, %v673
    %v675 = vlaneseq
    %v676 = vshrl.u32 %v675, 7
    %v677 = vsub.s32 1, %v676
    %v678 = vrot.slane %v669, %v677
    %681 = vmatprep.subr.mxu0 %v605
    %682 = vmatpush1.msra.mxu0 %v604
    %683 = vmatprep.subr.mxu0 %v607
    %684 = vmatpush1.msra.mxu0 %v606
    %685 = vmatprep.subr.mxu0 %v609
    %686 = vmatpush1.msra.mxu0 %v608
    %687 = vmatprep.subr.mxu0 %v611
    %688 = vmatpush1.msra.mxu0 %v610
    %689 = vmatprep.subr.mxu0 %v613
    %690 = vmatpush1.msra.mxu0 %v612
    %691 = vmatprep.subr.mxu0 %v615
    %692 = vmatpush1.msra.mxu0 %v614
    %693 = vmatprep.subr.mxu0 %v617
    %694 = vmatpush1.msra.mxu0 %v616
    %695 = vmatprep.subr.mxu0 %v619
    %696 = vmatpush1.msra.mxu0 %v618
    %697 = vmatprep.subr.mxu0 %v621
    %698 = vmatpush1.msra.mxu0 %v620
    %699 = vmatprep.subr.mxu0 %v623
    %700 = vmatpush1.msra.mxu0 %v622
    %701 = vmatprep.subr.mxu0 %v625
    %702 = vmatpush1.msra.mxu0 %v624
    %703 = vmatprep.subr.mxu0 %v627
    %704 = vmatpush1.msra.mxu0 %v626
    %705 = vmatprep.subr.mxu0 %v629
    %706 = vmatpush1.msra.mxu0 %v628
    %707 = vmatprep.subr.mxu0 %v631
    %708 = vmatpush1.msra.mxu0 %v630
    %709 = vmatprep.subr.mxu0 %v633
    %710 = vmatpush1.msra.mxu0 %v632
    %711 = vmatprep.subr.mxu0 %v635
    %712 = vmatpush1.msra.mxu0 %v634
    %713 = vmatprep.subr.mxu0 %v637
    %714 = vmatpush1.msra.mxu0 %v636
    %715 = vmatprep.subr.mxu0 %v639
    %716 = vmatpush1.msra.mxu0 %v638
    %717 = vmatprep.subr.mxu0 %v641
    %718 = vmatpush1.msra.mxu0 %v640
    %719 = vmatprep.subr.mxu0 %v643
    %720 = vmatpush1.msra.mxu0 %v642
    %721 = vmatprep.subr.mxu0 %v645
    %722 = vmatpush1.msra.mxu0 %v644
    %723 = vmatprep.subr.mxu0 %v647
    %724 = vmatpush1.msra.mxu0 %v646
    %725 = vmatprep.subr.mxu0 %v649
    %726 = vmatpush1.msra.mxu0 %v648
    %727 = vmatprep.subr.mxu0 %v651
    %728 = vmatpush1.msra.mxu0 %v650
    %729 = vmatprep.subr.mxu0 %v653
    %730 = vmatpush1.msra.mxu0 %v652
    %731 = vmatprep.subr.mxu0 %v655
    %732 = vmatpush1.msra.mxu0 %v654
    %733 = vmatprep.subr.mxu0 %v657
    %734 = vmatpush1.msra.mxu0 %v656
    %735 = vmatprep.subr.mxu0 %v659
    %736 = vmatpush1.msra.mxu0 %v658
    %737 = vmatprep.subr.mxu0 %v661
    %738 = vmatpush1.msra.mxu0 %v660
    %739 = vmatprep.subr.mxu0 %v663
    %740 = vmatpush1.msra.mxu0 %v662
    %741 = vmatprep.subr.mxu0 %v665
    %742 = vmatpush1.msra.mxu0 %v664
    %743 = vmatprep.subr.mxu0 %v667
    %744 = vmatpush1.msra.mxu0 %v666
    %745 = vmatprep.mubr.f32.mxu0 %v602
    %746 = vmatmul.mubr.f32.gmra.mrb[0].mxu0 %v601
    %v747 = vpop.f32.mrb[0].mxu0
    %v748 = vadd.f32 %v674, %v747
    %v749 = vpop.f32.mrb[0].mxu0
    %v750 = vadd.f32 %v678, %v749
    %751 = vdwg.mxu0
    %vm752 = vcmp.ge.f32.partialorder %v748, 0.0
    %vm753 = vcmp.ge.f32.partialorder %v750, 0.0
    %v754 = vmul.f32 %v748, 0.01
    %v755 = vmul.f32 %v750, 0.01
    %v756 = vsel %vm752, %v748, %v754
    %v757 = vsel %vm753, %v750, %v755
    %s758 = scalar_lea.vmem %s5, 2
    %v759 = vld [vmem:[%s758] ss:$8 sm:$0x3]
    %v761 = vlaneseq
    %v762 = vshrl.u32 %v761, 7
    %v763 = vsub.s32 0, %v762
    %v764 = vrot.slane %v759, %v763
    %v765 = vlaneseq
    %v766 = vshrl.u32 %v765, 7
    %v767 = vsub.s32 1, %v766
    %v768 = vrot.slane %v759, %v767
    %v771 = vmul.f32 %v756, %v764
    %v772 = vmul.f32 %v757, %v768
    %v773 = vadd.f32 %v771, %v772
    %774 = vadd.xlane.f32.xlu0 %v773
    %v775 = vpop.xlane.xlu0 %774
    %s776 = sld [smem:[#allocation8 + $0x100]]
    %v777 = vstv %s776
    %v778 = vadd.f32 %v775, %v777
    %s779 = scalar_lea.vmem %s6, 2
    %v780 = vld [vmem:[%s779] ss:$8 sm:$0x3]
    %v782 = vlaneseq
    %v783 = vshrl.u32 %v782, 7
    %v784 = vsub.s32 0, %v783
    %v785 = vrot.slane %v780, %v784
    %v786 = vlaneseq
    %v787 = vshrl.u32 %v786, 7
    %v788 = vsub.s32 1, %v787
    %v789 = vrot.slane %v780, %v788
    %v792 = vmul.f32 %v756, %v785
    %v793 = vmul.f32 %v757, %v789
    %v794 = vadd.f32 %v792, %v793
    %795 = vadd.xlane.f32.xlu0 %v794
    %v796 = vpop.xlane.xlu0 %795
    %s797 = sld [smem:[#allocation8 + $0x101]]
    %v798 = vstv %s797
    %v799 = vadd.f32 %v796, %v798
    %v800 = vtanh.pop %v778
    %v801 = vmul.f32 %v800, 1.442695
    %v802 = vpow.pop %v801
    %v803 = vmul.f32 %v316, %v802
    %v804 = vadd.f32 %v803, %v799
    %v805 = vadd.f32 %v561, %v800
    %s806 = scalar_lea.vmem %s1, 3
    %v807 = vld [vmem:[%s806] ss:$8 sm:$0x3]
    %809 = vset.pattern.permute.xlu0 0
    %810 = vperm.xlu0 %809, %v804
    %v811 = vpop.permute.xlu0 %810
    %v814 = vlaneseq
    %v815 = vshrl.u32 %v814, 7
    %v816 = vsub.s32 0, %v815
    %v817 = vrot.slane %v807, %v816
    %v818 = vlaneseq
    %v819 = vshrl.u32 %v818, 7
    %v820 = vsub.s32 1, %v819
    %v821 = vrot.slane %v807, %v820
    %v824 = vmul.f32 %v811, %v817
    %v825 = vmul.f32 %v811, %v821
    %s826 = scalar_lea.vmem [#allocation2], 3
    %v827 = vld [vmem:[%s826] ss:$8 sm:$0x3]
    %v829 = vlaneseq
    %v830 = vshrl.u32 %v829, 7
    %v831 = vsub.s32 0, %v830
    %v832 = vrot.slane %v827, %v831
    %v833 = vlaneseq
    %v834 = vshrl.u32 %v833, 7
    %v835 = vsub.s32 1, %v834
    %v836 = vrot.slane %v827, %v835
    %v839 = vadd.f32 %v824, %v832
    %v840 = vadd.f32 %v825, %v836
    %vm841 = vcmp.ge.f32.partialorder %v839, 0.0
    %vm842 = vcmp.ge.f32.partialorder %v840, 0.0
    %v843 = vmul.f32 %v839, 0.01
    %v844 = vmul.f32 %v840, 0.01
    %v845 = vsel %vm841, %v839, %v843
    %v846 = vsel %vm842, %v840, %v844
    %s847 = scalar_lea.vmem [#allocation5], 1536
    %v848 = vld [vmem:[%s847] sm:$0xff]
    %v849 = vld [vmem:[%s847 + $0x8] sm:$0xff]
    %v850 = vld [vmem:[%s847 + $0x10] sm:$0xff]
    %v851 = vld [vmem:[%s847 + $0x18] sm:$0xff]
    %v852 = vld [vmem:[%s847 + $0x20] sm:$0xff]
    %v853 = vld [vmem:[%s847 + $0x28] sm:$0xff]
    %v854 = vld [vmem:[%s847 + $0x30] sm:$0xff]
    %v855 = vld [vmem:[%s847 + $0x38] sm:$0xff]
    %v856 = vld [vmem:[%s847 + $0x40] sm:$0xff]
    %v857 = vld [vmem:[%s847 + $0x48] sm:$0xff]
    %v858 = vld [vmem:[%s847 + $0x50] sm:$0xff]
    %v859 = vld [vmem:[%s847 + $0x58] sm:$0xff]
    %v860 = vld [vmem:[%s847 + $0x60] sm:$0xff]
    %v861 = vld [vmem:[%s847 + $0x68] sm:$0xff]
    %v862 = vld [vmem:[%s847 + $0x70] sm:$0xff]
    %v863 = vld [vmem:[%s847 + $0x78] sm:$0xff]
    %v864 = vld [vmem:[%s847 + $0x80] sm:$0xff]
    %v865 = vld [vmem:[%s847 + $0x88] sm:$0xff]
    %v866 = vld [vmem:[%s847 + $0x90] sm:$0xff]
    %v867 = vld [vmem:[%s847 + $0x98] sm:$0xff]
    %v868 = vld [vmem:[%s847 + $0xa0] sm:$0xff]
    %v869 = vld [vmem:[%s847 + $0xa8] sm:$0xff]
    %v870 = vld [vmem:[%s847 + $0xb0] sm:$0xff]
    %v871 = vld [vmem:[%s847 + $0xb8] sm:$0xff]
    %v872 = vld [vmem:[%s847 + $0xc0] sm:$0xff]
    %v873 = vld [vmem:[%s847 + $0xc8] sm:$0xff]
    %v874 = vld [vmem:[%s847 + $0xd0] sm:$0xff]
    %v875 = vld [vmem:[%s847 + $0xd8] sm:$0xff]
    %v876 = vld [vmem:[%s847 + $0xe0] sm:$0xff]
    %v877 = vld [vmem:[%s847 + $0xe8] sm:$0xff]
    %v878 = vld [vmem:[%s847 + $0xf0] sm:$0xff]
    %v879 = vld [vmem:[%s847 + $0xf8] sm:$0xff]
    %v880 = vld [vmem:[%s847 + $0x100] sm:$0xff]
    %v881 = vld [vmem:[%s847 + $0x108] sm:$0xff]
    %v882 = vld [vmem:[%s847 + $0x110] sm:$0xff]
    %v883 = vld [vmem:[%s847 + $0x118] sm:$0xff]
    %v884 = vld [vmem:[%s847 + $0x120] sm:$0xff]
    %v885 = vld [vmem:[%s847 + $0x128] sm:$0xff]
    %v886 = vld [vmem:[%s847 + $0x130] sm:$0xff]
    %v887 = vld [vmem:[%s847 + $0x138] sm:$0xff]
    %v888 = vld [vmem:[%s847 + $0x140] sm:$0xff]
    %v889 = vld [vmem:[%s847 + $0x148] sm:$0xff]
    %v890 = vld [vmem:[%s847 + $0x150] sm:$0xff]
    %v891 = vld [vmem:[%s847 + $0x158] sm:$0xff]
    %v892 = vld [vmem:[%s847 + $0x160] sm:$0xff]
    %v893 = vld [vmem:[%s847 + $0x168] sm:$0xff]
    %v894 = vld [vmem:[%s847 + $0x170] sm:$0xff]
    %v895 = vld [vmem:[%s847 + $0x178] sm:$0xff]
    %v896 = vld [vmem:[%s847 + $0x180] sm:$0xff]
    %v897 = vld [vmem:[%s847 + $0x188] sm:$0xff]
    %v898 = vld [vmem:[%s847 + $0x190] sm:$0xff]
    %v899 = vld [vmem:[%s847 + $0x198] sm:$0xff]
    %v900 = vld [vmem:[%s847 + $0x1a0] sm:$0xff]
    %v901 = vld [vmem:[%s847 + $0x1a8] sm:$0xff]
    %v902 = vld [vmem:[%s847 + $0x1b0] sm:$0xff]
    %v903 = vld [vmem:[%s847 + $0x1b8] sm:$0xff]
    %v904 = vld [vmem:[%s847 + $0x1c0] sm:$0xff]
    %v905 = vld [vmem:[%s847 + $0x1c8] sm:$0xff]
    %v906 = vld [vmem:[%s847 + $0x1d0] sm:$0xff]
    %v907 = vld [vmem:[%s847 + $0x1d8] sm:$0xff]
    %v908 = vld [vmem:[%s847 + $0x1e0] sm:$0xff]
    %v909 = vld [vmem:[%s847 + $0x1e8] sm:$0xff]
    %v910 = vld [vmem:[%s847 + $0x1f0] sm:$0xff]
    %v911 = vld [vmem:[%s847 + $0x1f8] sm:$0xff]
    %s912 = scalar_lea.vmem [#allocation7], 3
    %v913 = vld [vmem:[%s912] ss:$8 sm:$0x3]
    %v915 = vlaneseq
    %v916 = vshrl.u32 %v915, 7
    %v917 = vsub.s32 0, %v916
    %v918 = vrot.slane %v913, %v917
    %v919 = vlaneseq
    %v920 = vshrl.u32 %v919, 7
    %v921 = vsub.s32 1, %v920
    %v922 = vrot.slane %v913, %v921
    %925 = vmatprep.subr.mxu0 %v849
    %926 = vmatpush1.msra.mxu0 %v848
    %927 = vmatprep.subr.mxu0 %v851
    %928 = vmatpush1.msra.mxu0 %v850
    %929 = vmatprep.subr.mxu0 %v853
    %930 = vmatpush1.msra.mxu0 %v852
    %931 = vmatprep.subr.mxu0 %v855
    %932 = vmatpush1.msra.mxu0 %v854
    %933 = vmatprep.subr.mxu0 %v857
    %934 = vmatpush1.msra.mxu0 %v856
    %935 = vmatprep.subr.mxu0 %v859
    %936 = vmatpush1.msra.mxu0 %v858
    %937 = vmatprep.subr.mxu0 %v861
    %938 = vmatpush1.msra.mxu0 %v860
    %939 = vmatprep.subr.mxu0 %v863
    %940 = vmatpush1.msra.mxu0 %v862
    %941 = vmatprep.subr.mxu0 %v865
    %942 = vmatpush1.msra.mxu0 %v864
    %943 = vmatprep.subr.mxu0 %v867
    %944 = vmatpush1.msra.mxu0 %v866
    %945 = vmatprep.subr.mxu0 %v869
    %946 = vmatpush1.msra.mxu0 %v868
    %947 = vmatprep.subr.mxu0 %v871
    %948 = vmatpush1.msra.mxu0 %v870
    %949 = vmatprep.subr.mxu0 %v873
    %950 = vmatpush1.msra.mxu0 %v872
    %951 = vmatprep.subr.mxu0 %v875
    %952 = vmatpush1.msra.mxu0 %v874
    %953 = vmatprep.subr.mxu0 %v877
    %954 = vmatpush1.msra.mxu0 %v876
    %955 = vmatprep.subr.mxu0 %v879
    %956 = vmatpush1.msra.mxu0 %v878
    %957 = vmatprep.subr.mxu0 %v881
    %958 = vmatpush1.msra.mxu0 %v880
    %959 = vmatprep.subr.mxu0 %v883
    %960 = vmatpush1.msra.mxu0 %v882
    %961 = vmatprep.subr.mxu0 %v885
    %962 = vmatpush1.msra.mxu0 %v884
    %963 = vmatprep.subr.mxu0 %v887
    %964 = vmatpush1.msra.mxu0 %v886
    %965 = vmatprep.subr.mxu0 %v889
    %966 = vmatpush1.msra.mxu0 %v888
    %967 = vmatprep.subr.mxu0 %v891
    %968 = vmatpush1.msra.mxu0 %v890
    %969 = vmatprep.subr.mxu0 %v893
    %970 = vmatpush1.msra.mxu0 %v892
    %971 = vmatprep.subr.mxu0 %v895
    %972 = vmatpush1.msra.mxu0 %v894
    %973 = vmatprep.subr.mxu0 %v897
    %974 = vmatpush1.msra.mxu0 %v896
    %975 = vmatprep.subr.mxu0 %v899
    %976 = vmatpush1.msra.mxu0 %v898
    %977 = vmatprep.subr.mxu0 %v901
    %978 = vmatpush1.msra.mxu0 %v900
    %979 = vmatprep.subr.mxu0 %v903
    %980 = vmatpush1.msra.mxu0 %v902
    %981 = vmatprep.subr.mxu0 %v905
    %982 = vmatpush1.msra.mxu0 %v904
    %983 = vmatprep.subr.mxu0 %v907
    %984 = vmatpush1.msra.mxu0 %v906
    %985 = vmatprep.subr.mxu0 %v909
    %986 = vmatpush1.msra.mxu0 %v908
    %987 = vmatprep.subr.mxu0 %v911
    %988 = vmatpush1.msra.mxu0 %v910
    %989 = vmatprep.mubr.f32.mxu0 %v846
    %990 = vmatmul.mubr.f32.gmra.mrb[0].mxu0 %v845
    %v991 = vpop.f32.mrb[0].mxu0
    %v992 = vadd.f32 %v918, %v991
    %v993 = vpop.f32.mrb[0].mxu0
    %v994 = vadd.f32 %v922, %v993
    %995 = vdwg.mxu0
    %vm996 = vcmp.ge.f32.partialorder %v992, 0.0
    %vm997 = vcmp.ge.f32.partialorder %v994, 0.0
    %v998 = vmul.f32 %v992, 0.01
    %v999 = vmul.f32 %v994, 0.01
    %v1000 = vsel %vm996, %v992, %v998
    %v1001 = vsel %vm997, %v994, %v999
    %s1002 = scalar_lea.vmem %s5, 3
    %v1003 = vld [vmem:[%s1002] ss:$8 sm:$0x3]
    %v1005 = vlaneseq
    %v1006 = vshrl.u32 %v1005, 7
    %v1007 = vsub.s32 0, %v1006
    %v1008 = vrot.slane %v1003, %v1007
    %v1009 = vlaneseq
    %v1010 = vshrl.u32 %v1009, 7
    %v1011 = vsub.s32 1, %v1010
    %v1012 = vrot.slane %v1003, %v1011
    %v1015 = vmul.f32 %v1000, %v1008
    %v1016 = vmul.f32 %v1001, %v1012
    %v1017 = vadd.f32 %v1015, %v1016
    %1018 = vadd.xlane.f32.xlu0 %v1017
    %v1019 = vpop.xlane.xlu0 %1018
    %s1020 = sld [smem:[#allocation8 + $0x180]]
    %v1021 = vstv %s1020
    %v1022 = vadd.f32 %v1019, %v1021
    %s1023 = scalar_lea.vmem %s6, 3
    %v1024 = vld [vmem:[%s1023] ss:$8 sm:$0x3]
    %v1026 = vlaneseq
    %v1027 = vshrl.u32 %v1026, 7
    %v1028 = vsub.s32 0, %v1027
    %v1029 = vrot.slane %v1024, %v1028
    %v1030 = vlaneseq
    %v1031 = vshrl.u32 %v1030, 7
    %v1032 = vsub.s32 1, %v1031
    %v1033 = vrot.slane %v1024, %v1032
    %v1036 = vmul.f32 %v1000, %v1029
    %v1037 = vmul.f32 %v1001, %v1033
    %v1038 = vadd.f32 %v1036, %v1037
    %1039 = vadd.xlane.f32.xlu0 %v1038
    %v1040 = vpop.xlane.xlu0 %1039
    %s1041 = sld [smem:[#allocation8 + $0x181]]
    %v1042 = vstv %s1041
    %v1043 = vadd.f32 %v1040, %v1042
    %v1044 = vtanh.pop %v1022
    %v1045 = vmul.f32 %v1044, 1.442695
    %v1046 = vpow.pop %v1045
    %v1047 = vmul.f32 %v560, %v1046
    %v1048 = vadd.f32 %v1047, %v1043
    %v1049 = vadd.f32 %v805, %v1044
    %s1050 = scalar_lea.vmem %s1, 4
    %v1051 = vld [vmem:[%s1050] ss:$8 sm:$0x3]
    %1053 = vset.pattern.permute.xlu0 1
    %1054 = vperm.xlu0 %1053, %v1048
    %v1055 = vpop.permute.xlu0 %1054
    %v1058 = vlaneseq
    %v1059 = vshrl.u32 %v1058, 7
    %v1060 = vsub.s32 0, %v1059
    %v1061 = vrot.slane %v1051, %v1060
    %v1062 = vlaneseq
    %v1063 = vshrl.u32 %v1062, 7
    %v1064 = vsub.s32 1, %v1063
    %v1065 = vrot.slane %v1051, %v1064
    %v1068 = vmul.f32 %v1055, %v1061
    %v1069 = vmul.f32 %v1055, %v1065
    %s1070 = scalar_lea.vmem [#allocation2], 4
    %v1071 = vld [vmem:[%s1070] ss:$8 sm:$0x3]
    %v1073 = vlaneseq
    %v1074 = vshrl.u32 %v1073, 7
    %v1075 = vsub.s32 0, %v1074
    %v1076 = vrot.slane %v1071, %v1075
    %v1077 = vlaneseq
    %v1078 = vshrl.u32 %v1077, 7
    %v1079 = vsub.s32 1, %v1078
    %v1080 = vrot.slane %v1071, %v1079
    %v1083 = vadd.f32 %v1068, %v1076
    %v1084 = vadd.f32 %v1069, %v1080
    %vm1085 = vcmp.ge.f32.partialorder %v1083, 0.0
    %vm1086 = vcmp.ge.f32.partialorder %v1084, 0.0
    %v1087 = vmul.f32 %v1083, 0.01
    %v1088 = vmul.f32 %v1084, 0.01
    %v1089 = vsel %vm1085, %v1083, %v1087
    %v1090 = vsel %vm1086, %v1084, %v1088
    %s1091 = scalar_lea.vmem [#allocation5], 2048
    %v1092 = vld [vmem:[%s1091] sm:$0xff]
    %v1093 = vld [vmem:[%s1091 + $0x8] sm:$0xff]
    %v1094 = vld [vmem:[%s1091 + $0x10] sm:$0xff]
    %v1095 = vld [vmem:[%s1091 + $0x18] sm:$0xff]
    %v1096 = vld [vmem:[%s1091 + $0x20] sm:$0xff]
    %v1097 = vld [vmem:[%s1091 + $0x28] sm:$0xff]
    %v1098 = vld [vmem:[%s1091 + $0x30] sm:$0xff]
    %v1099 = vld [vmem:[%s1091 + $0x38] sm:$0xff]
    %v1100 = vld [vmem:[%s1091 + $0x40] sm:$0xff]
    %v1101 = vld [vmem:[%s1091 + $0x48] sm:$0xff]
    %v1102 = vld [vmem:[%s1091 + $0x50] sm:$0xff]
    %v1103 = vld [vmem:[%s1091 + $0x58] sm:$0xff]
    %v1104 = vld [vmem:[%s1091 + $0x60] sm:$0xff]
    %v1105 = vld [vmem:[%s1091 + $0x68] sm:$0xff]
    %v1106 = vld [vmem:[%s1091 + $0x70] sm:$0xff]
    %v1107 = vld [vmem:[%s1091 + $0x78] sm:$0xff]
    %v1108 = vld [vmem:[%s1091 + $0x80] sm:$0xff]
    %v1109 = vld [vmem:[%s1091 + $0x88] sm:$0xff]
    %v1110 = vld [vmem:[%s1091 + $0x90] sm:$0xff]
    %v1111 = vld [vmem:[%s1091 + $0x98] sm:$0xff]
    %v1112 = vld [vmem:[%s1091 + $0xa0] sm:$0xff]
    %v1113 = vld [vmem:[%s1091 + $0xa8] sm:$0xff]
    %v1114 = vld [vmem:[%s1091 + $0xb0] sm:$0xff]
    %v1115 = vld [vmem:[%s1091 + $0xb8] sm:$0xff]
    %v1116 = vld [vmem:[%s1091 + $0xc0] sm:$0xff]
    %v1117 = vld [vmem:[%s1091 + $0xc8] sm:$0xff]
    %v1118 = vld [vmem:[%s1091 + $0xd0] sm:$0xff]
    %v1119 = vld [vmem:[%s1091 + $0xd8] sm:$0xff]
    %v1120 = vld [vmem:[%s1091 + $0xe0] sm:$0xff]
    %v1121 = vld [vmem:[%s1091 + $0xe8] sm:$0xff]
    %v1122 = vld [vmem:[%s1091 + $0xf0] sm:$0xff]
    %v1123 = vld [vmem:[%s1091 + $0xf8] sm:$0xff]
    %v1124 = vld [vmem:[%s1091 + $0x100] sm:$0xff]
    %v1125 = vld [vmem:[%s1091 + $0x108] sm:$0xff]
    %v1126 = vld [vmem:[%s1091 + $0x110] sm:$0xff]
    %v1127 = vld [vmem:[%s1091 + $0x118] sm:$0xff]
    %v1128 = vld [vmem:[%s1091 + $0x120] sm:$0xff]
    %v1129 = vld [vmem:[%s1091 + $0x128] sm:$0xff]
    %v1130 = vld [vmem:[%s1091 + $0x130] sm:$0xff]
    %v1131 = vld [vmem:[%s1091 + $0x138] sm:$0xff]
    %v1132 = vld [vmem:[%s1091 + $0x140] sm:$0xff]
    %v1133 = vld [vmem:[%s1091 + $0x148] sm:$0xff]
    %v1134 = vld [vmem:[%s1091 + $0x150] sm:$0xff]
    %v1135 = vld [vmem:[%s1091 + $0x158] sm:$0xff]
    %v1136 = vld [vmem:[%s1091 + $0x160] sm:$0xff]
    %v1137 = vld [vmem:[%s1091 + $0x168] sm:$0xff]
    %v1138 = vld [vmem:[%s1091 + $0x170] sm:$0xff]
    %v1139 = vld [vmem:[%s1091 + $0x178] sm:$0xff]
    %v1140 = vld [vmem:[%s1091 + $0x180] sm:$0xff]
    %v1141 = vld [vmem:[%s1091 + $0x188] sm:$0xff]
    %v1142 = vld [vmem:[%s1091 + $0x190] sm:$0xff]
    %v1143 = vld [vmem:[%s1091 + $0x198] sm:$0xff]
    %v1144 = vld [vmem:[%s1091 + $0x1a0] sm:$0xff]
    %v1145 = vld [vmem:[%s1091 + $0x1a8] sm:$0xff]
    %v1146 = vld [vmem:[%s1091 + $0x1b0] sm:$0xff]
    %v1147 = vld [vmem:[%s1091 + $0x1b8] sm:$0xff]
    %v1148 = vld [vmem:[%s1091 + $0x1c0] sm:$0xff]
    %v1149 = vld [vmem:[%s1091 + $0x1c8] sm:$0xff]
    %v1150 = vld [vmem:[%s1091 + $0x1d0] sm:$0xff]
    %v1151 = vld [vmem:[%s1091 + $0x1d8] sm:$0xff]
    %v1152 = vld [vmem:[%s1091 + $0x1e0] sm:$0xff]
    %v1153 = vld [vmem:[%s1091 + $0x1e8] sm:$0xff]
    %v1154 = vld [vmem:[%s1091 + $0x1f0] sm:$0xff]
    %v1155 = vld [vmem:[%s1091 + $0x1f8] sm:$0xff]
    %s1156 = scalar_lea.vmem [#allocation7], 4
    %v1157 = vld [vmem:[%s1156] ss:$8 sm:$0x3]
    %v1159 = vlaneseq
    %v1160 = vshrl.u32 %v1159, 7
    %v1161 = vsub.s32 0, %v1160
    %v1162 = vrot.slane %v1157, %v1161
    %v1163 = vlaneseq
    %v1164 = vshrl.u32 %v1163, 7
    %v1165 = vsub.s32 1, %v1164
    %v1166 = vrot.slane %v1157, %v1165
    %1169 = vmatprep.subr.mxu0 %v1093
    %1170 = vmatpush1.msra.mxu0 %v1092
    %1171 = vmatprep.subr.mxu0 %v1095
    %1172 = vmatpush1.msra.mxu0 %v1094
    %1173 = vmatprep.subr.mxu0 %v1097
    %1174 = vmatpush1.msra.mxu0 %v1096
    %1175 = vmatprep.subr.mxu0 %v1099
    %1176 = vmatpush1.msra.mxu0 %v1098
    %1177 = vmatprep.subr.mxu0 %v1101
    %1178 = vmatpush1.msra.mxu0 %v1100
    %1179 = vmatprep.subr.mxu0 %v1103
    %1180 = vmatpush1.msra.mxu0 %v1102
    %1181 = vmatprep.subr.mxu0 %v1105
    %1182 = vmatpush1.msra.mxu0 %v1104
    %1183 = vmatprep.subr.mxu0 %v1107
    %1184 = vmatpush1.msra.mxu0 %v1106
    %1185 = vmatprep.subr.mxu0 %v1109
    %1186 = vmatpush1.msra.mxu0 %v1108
    %1187 = vmatprep.subr.mxu0 %v1111
    %1188 = vmatpush1.msra.mxu0 %v1110
    %1189 = vmatprep.subr.mxu0 %v1113
    %1190 = vmatpush1.msra.mxu0 %v1112
    %1191 = vmatprep.subr.mxu0 %v1115
    %1192 = vmatpush1.msra.mxu0 %v1114
    %1193 = vmatprep.subr.mxu0 %v1117
    %1194 = vmatpush1.msra.mxu0 %v1116
    %1195 = vmatprep.subr.mxu0 %v1119
    %1196 = vmatpush1.msra.mxu0 %v1118
    %1197 = vmatprep.subr.mxu0 %v1121
    %1198 = vmatpush1.msra.mxu0 %v1120
    %1199 = vmatprep.subr.mxu0 %v1123
    %1200 = vmatpush1.msra.mxu0 %v1122
    %1201 = vmatprep.subr.mxu0 %v1125
    %1202 = vmatpush1.msra.mxu0 %v1124
    %1203 = vmatprep.subr.mxu0 %v1127
    %1204 = vmatpush1.msra.mxu0 %v1126
    %1205 = vmatprep.subr.mxu0 %v1129
    %1206 = vmatpush1.msra.mxu0 %v1128
    %1207 = vmatprep.subr.mxu0 %v1131
    %1208 = vmatpush1.msra.mxu0 %v1130
    %1209 = vmatprep.subr.mxu0 %v1133
    %1210 = vmatpush1.msra.mxu0 %v1132
    %1211 = vmatprep.subr.mxu0 %v1135
    %1212 = vmatpush1.msra.mxu0 %v1134
    %1213 = vmatprep.subr.mxu0 %v1137
    %1214 = vmatpush1.msra.mxu0 %v1136
    %1215 = vmatprep.subr.mxu0 %v1139
    %1216 = vmatpush1.msra.mxu0 %v1138
    %1217 = vmatprep.subr.mxu0 %v1141
    %1218 = vmatpush1.msra.mxu0 %v1140
    %1219 = vmatprep.subr.mxu0 %v1143
    %1220 = vmatpush1.msra.mxu0 %v1142
    %1221 = vmatprep.subr.mxu0 %v1145
    %1222 = vmatpush1.msra.mxu0 %v1144
    %1223 = vmatprep.subr.mxu0 %v1147
    %1224 = vmatpush1.msra.mxu0 %v1146
    %1225 = vmatprep.subr.mxu0 %v1149
    %1226 = vmatpush1.msra.mxu0 %v1148
    %1227 = vmatprep.subr.mxu0 %v1151
    %1228 = vmatpush1.msra.mxu0 %v1150
    %1229 = vmatprep.subr.mxu0 %v1153
    %1230 = vmatpush1.msra.mxu0 %v1152
    %1231 = vmatprep.subr.mxu0 %v1155
    %1232 = vmatpush1.msra.mxu0 %v1154
    %1233 = vmatprep.mubr.f32.mxu0 %v1090
    %1234 = vmatmul.mubr.f32.gmra.mrb[0].mxu0 %v1089
    %v1235 = vpop.f32.mrb[0].mxu0
    %v1236 = vadd.f32 %v1162, %v1235
    %v1237 = vpop.f32.mrb[0].mxu0
    %v1238 = vadd.f32 %v1166, %v1237
    %1239 = vdwg.mxu0
    %vm1240 = vcmp.ge.f32.partialorder %v1236, 0.0
    %vm1241 = vcmp.ge.f32.partialorder %v1238, 0.0
    %v1242 = vmul.f32 %v1236, 0.01
    %v1243 = vmul.f32 %v1238, 0.01
    %v1244 = vsel %vm1240, %v1236, %v1242
    %v1245 = vsel %vm1241, %v1238, %v1243
    %s1246 = scalar_lea.vmem %s5, 4
    %v1247 = vld [vmem:[%s1246] ss:$8 sm:$0x3]
    %v1249 = vlaneseq
    %v1250 = vshrl.u32 %v1249, 7
    %v1251 = vsub.s32 0, %v1250
    %v1252 = vrot.slane %v1247, %v1251
    %v1253 = vlaneseq
    %v1254 = vshrl.u32 %v1253, 7
    %v1255 = vsub.s32 1, %v1254
    %v1256 = vrot.slane %v1247, %v1255
    %v1259 = vmul.f32 %v1244, %v1252
    %v1260 = vmul.f32 %v1245, %v1256
    %v1261 = vadd.f32 %v1259, %v1260
    %1262 = vadd.xlane.f32.xlu0 %v1261
    %v1263 = vpop.xlane.xlu0 %1262
    %s1264 = sld [smem:[#allocation8 + $0x200]]
    %v1265 = vstv %s1264
    %v1266 = vadd.f32 %v1263, %v1265
    %s1267 = scalar_lea.vmem %s6, 4
    %v1268 = vld [vmem:[%s1267] ss:$8 sm:$0x3]
    %v1270 = vlaneseq
    %v1271 = vshrl.u32 %v1270, 7
    %v1272 = vsub.s32 0, %v1271
    %v1273 = vrot.slane %v1268, %v1272
    %v1274 = vlaneseq
    %v1275 = vshrl.u32 %v1274, 7
    %v1276 = vsub.s32 1, %v1275
    %v1277 = vrot.slane %v1268, %v1276
    %v1280 = vmul.f32 %v1244, %v1273
    %v1281 = vmul.f32 %v1245, %v1277
    %v1282 = vadd.f32 %v1280, %v1281
    %1283 = vadd.xlane.f32.xlu0 %v1282
    %v1284 = vpop.xlane.xlu0 %1283
    %s1285 = sld [smem:[#allocation8 + $0x201]]
    %v1286 = vstv %s1285
    %v1287 = vadd.f32 %v1284, %v1286
    %v1288 = vtanh.pop %v1266
    %v1289 = vmul.f32 %v1288, 1.442695
    %v1290 = vpow.pop %v1289
    %v1291 = vmul.f32 %v804, %v1290
    %v1292 = vadd.f32 %v1291, %v1287
    %v1293 = vadd.f32 %v1049, %v1288
    %s1294 = scalar_lea.vmem %s1, 5
    %v1295 = vld [vmem:[%s1294] ss:$8 sm:$0x3]
    %1297 = vset.pattern.permute.xlu0 0
    %1298 = vperm.xlu0 %1297, %v1292
    %v1299 = vpop.permute.xlu0 %1298
    %v1302 = vlaneseq
    %v1303 = vshrl.u32 %v1302, 7
    %v1304 = vsub.s32 0, %v1303
    %v1305 = vrot.slane %v1295, %v1304
    %v1306 = vlaneseq
    %v1307 = vshrl.u32 %v1306, 7
    %v1308 = vsub.s32 1, %v1307
    %v1309 = vrot.slane %v1295, %v1308
    %v1312 = vmul.f32 %v1299, %v1305
    %v1313 = vmul.f32 %v1299, %v1309
    %s1314 = scalar_lea.vmem [#allocation2], 5
    %v1315 = vld [vmem:[%s1314] ss:$8 sm:$0x3]
    %v1317 = vlaneseq
    %v1318 = vshrl.u32 %v1317, 7
    %v1319 = vsub.s32 0, %v1318
    %v1320 = vrot.slane %v1315, %v1319
    %v1321 = vlaneseq
    %v1322 = vshrl.u32 %v1321, 7
    %v1323 = vsub.s32 1, %v1322
    %v1324 = vrot.slane %v1315, %v1323
    %v1327 = vadd.f32 %v1312, %v1320
    %v1328 = vadd.f32 %v1313, %v1324
    %vm1329 = vcmp.ge.f32.partialorder %v1327, 0.0
    %vm1330 = vcmp.ge.f32.partialorder %v1328, 0.0
    %v1331 = vmul.f32 %v1327, 0.01
    %v1332 = vmul.f32 %v1328, 0.01
    %v1333 = vsel %vm1329, %v1327, %v1331
    %v1334 = vsel %vm1330, %v1328, %v1332
    %s1335 = scalar_lea.vmem [#allocation5], 2560
    %v1336 = vld [vmem:[%s1335] sm:$0xff]
    %v1337 = vld [vmem:[%s1335 + $0x8] sm:$0xff]
    %v1338 = vld [vmem:[%s1335 + $0x10] sm:$0xff]
    %v1339 = vld [vmem:[%s1335 + $0x18] sm:$0xff]
    %v1340 = vld [vmem:[%s1335 + $0x20] sm:$0xff]
    %v1341 = vld [vmem:[%s1335 + $0x28] sm:$0xff]
    %v1342 = vld [vmem:[%s1335 + $0x30] sm:$0xff]
    %v1343 = vld [vmem:[%s1335 + $0x38] sm:$0xff]
    %v1344 = vld [vmem:[%s1335 + $0x40] sm:$0xff]
    %v1345 = vld [vmem:[%s1335 + $0x48] sm:$0xff]
    %v1346 = vld [vmem:[%s1335 + $0x50] sm:$0xff]
    %v1347 = vld [vmem:[%s1335 + $0x58] sm:$0xff]
    %v1348 = vld [vmem:[%s1335 + $0x60] sm:$0xff]
    %v1349 = vld [vmem:[%s1335 + $0x68] sm:$0xff]
    %v1350 = vld [vmem:[%s1335 + $0x70] sm:$0xff]
    %v1351 = vld [vmem:[%s1335 + $0x78] sm:$0xff]
    %v1352 = vld [vmem:[%s1335 + $0x80] sm:$0xff]
    %v1353 = vld [vmem:[%s1335 + $0x88] sm:$0xff]
    %v1354 = vld [vmem:[%s1335 + $0x90] sm:$0xff]
    %v1355 = vld [vmem:[%s1335 + $0x98] sm:$0xff]
    %v1356 = vld [vmem:[%s1335 + $0xa0] sm:$0xff]
    %v1357 = vld [vmem:[%s1335 + $0xa8] sm:$0xff]
    %v1358 = vld [vmem:[%s1335 + $0xb0] sm:$0xff]
    %v1359 = vld [vmem:[%s1335 + $0xb8] sm:$0xff]
    %v1360 = vld [vmem:[%s1335 + $0xc0] sm:$0xff]
    %v1361 = vld [vmem:[%s1335 + $0xc8] sm:$0xff]
    %v1362 = vld [vmem:[%s1335 + $0xd0] sm:$0xff]
    %v1363 = vld [vmem:[%s1335 + $0xd8] sm:$0xff]
    %v1364 = vld [vmem:[%s1335 + $0xe0] sm:$0xff]
    %v1365 = vld [vmem:[%s1335 + $0xe8] sm:$0xff]
    %v1366 = vld [vmem:[%s1335 + $0xf0] sm:$0xff]
    %v1367 = vld [vmem:[%s1335 + $0xf8] sm:$0xff]
    %v1368 = vld [vmem:[%s1335 + $0x100] sm:$0xff]
    %v1369 = vld [vmem:[%s1335 + $0x108] sm:$0xff]
    %v1370 = vld [vmem:[%s1335 + $0x110] sm:$0xff]
    %v1371 = vld [vmem:[%s1335 + $0x118] sm:$0xff]
    %v1372 = vld [vmem:[%s1335 + $0x120] sm:$0xff]
    %v1373 = vld [vmem:[%s1335 + $0x128] sm:$0xff]
    %v1374 = vld [vmem:[%s1335 + $0x130] sm:$0xff]
    %v1375 = vld [vmem:[%s1335 + $0x138] sm:$0xff]
    %v1376 = vld [vmem:[%s1335 + $0x140] sm:$0xff]
    %v1377 = vld [vmem:[%s1335 + $0x148] sm:$0xff]
    %v1378 = vld [vmem:[%s1335 + $0x150] sm:$0xff]
    %v1379 = vld [vmem:[%s1335 + $0x158] sm:$0xff]
    %v1380 = vld [vmem:[%s1335 + $0x160] sm:$0xff]
    %v1381 = vld [vmem:[%s1335 + $0x168] sm:$0xff]
    %v1382 = vld [vmem:[%s1335 + $0x170] sm:$0xff]
    %v1383 = vld [vmem:[%s1335 + $0x178] sm:$0xff]
    %v1384 = vld [vmem:[%s1335 + $0x180] sm:$0xff]
    %v1385 = vld [vmem:[%s1335 + $0x188] sm:$0xff]
    %v1386 = vld [vmem:[%s1335 + $0x190] sm:$0xff]
    %v1387 = vld [vmem:[%s1335 + $0x198] sm:$0xff]
    %v1388 = vld [vmem:[%s1335 + $0x1a0] sm:$0xff]
    %v1389 = vld [vmem:[%s1335 + $0x1a8] sm:$0xff]
    %v1390 = vld [vmem:[%s1335 + $0x1b0] sm:$0xff]
    %v1391 = vld [vmem:[%s1335 + $0x1b8] sm:$0xff]
    %v1392 = vld [vmem:[%s1335 + $0x1c0] sm:$0xff]
    %v1393 = vld [vmem:[%s1335 + $0x1c8] sm:$0xff]
    %v1394 = vld [vmem:[%s1335 + $0x1d0] sm:$0xff]
    %v1395 = vld [vmem:[%s1335 + $0x1d8] sm:$0xff]
    %v1396 = vld [vmem:[%s1335 + $0x1e0] sm:$0xff]
    %v1397 = vld [vmem:[%s1335 + $0x1e8] sm:$0xff]
    %v1398 = vld [vmem:[%s1335 + $0x1f0] sm:$0xff]
    %v1399 = vld [vmem:[%s1335 + $0x1f8] sm:$0xff]
    %s1400 = scalar_lea.vmem [#allocation7], 5
    %v1401 = vld [vmem:[%s1400] ss:$8 sm:$0x3]
    %v1403 = vlaneseq
    %v1404 = vshrl.u32 %v1403, 7
    %v1405 = vsub.s32 0, %v1404
    %v1406 = vrot.slane %v1401, %v1405
    %v1407 = vlaneseq
    %v1408 = vshrl.u32 %v1407, 7
    %v1409 = vsub.s32 1, %v1408
    %v1410 = vrot.slane %v1401, %v1409
    %1413 = vmatprep.subr.mxu0 %v1337
    %1414 = vmatpush1.msra.mxu0 %v1336
    %1415 = vmatprep.subr.mxu0 %v1339
    %1416 = vmatpush1.msra.mxu0 %v1338
    %1417 = vmatprep.subr.mxu0 %v1341
    %1418 = vmatpush1.msra.mxu0 %v1340
    %1419 = vmatprep.subr.mxu0 %v1343
    %1420 = vmatpush1.msra.mxu0 %v1342
    %1421 = vmatprep.subr.mxu0 %v1345
    %1422 = vmatpush1.msra.mxu0 %v1344
    %1423 = vmatprep.subr.mxu0 %v1347
    %1424 = vmatpush1.msra.mxu0 %v1346
    %1425 = vmatprep.subr.mxu0 %v1349
    %1426 = vmatpush1.msra.mxu0 %v1348
    %1427 = vmatprep.subr.mxu0 %v1351
    %1428 = vmatpush1.msra.mxu0 %v1350
    %1429 = vmatprep.subr.mxu0 %v1353
    %1430 = vmatpush1.msra.mxu0 %v1352
    %1431 = vmatprep.subr.mxu0 %v1355
    %1432 = vmatpush1.msra.mxu0 %v1354
    %1433 = vmatprep.subr.mxu0 %v1357
    %1434 = vmatpush1.msra.mxu0 %v1356
    %1435 = vmatprep.subr.mxu0 %v1359
    %1436 = vmatpush1.msra.mxu0 %v1358
    %1437 = vmatprep.subr.mxu0 %v1361
    %1438 = vmatpush1.msra.mxu0 %v1360
    %1439 = vmatprep.subr.mxu0 %v1363
    %1440 = vmatpush1.msra.mxu0 %v1362
    %1441 = vmatprep.subr.mxu0 %v1365
    %1442 = vmatpush1.msra.mxu0 %v1364
    %1443 = vmatprep.subr.mxu0 %v1367
    %1444 = vmatpush1.msra.mxu0 %v1366
    %1445 = vmatprep.subr.mxu0 %v1369
    %1446 = vmatpush1.msra.mxu0 %v1368
    %1447 = vmatprep.subr.mxu0 %v1371
    %1448 = vmatpush1.msra.mxu0 %v1370
    %1449 = vmatprep.subr.mxu0 %v1373
    %1450 = vmatpush1.msra.mxu0 %v1372
    %1451 = vmatprep.subr.mxu0 %v1375
    %1452 = vmatpush1.msra.mxu0 %v1374
    %1453 = vmatprep.subr.mxu0 %v1377
    %1454 = vmatpush1.msra.mxu0 %v1376
    %1455 = vmatprep.subr.mxu0 %v1379
    %1456 = vmatpush1.msra.mxu0 %v1378
    %1457 = vmatprep.subr.mxu0 %v1381
    %1458 = vmatpush1.msra.mxu0 %v1380
    %1459 = vmatprep.subr.mxu0 %v1383
    %1460 = vmatpush1.msra.mxu0 %v1382
    %1461 = vmatprep.subr.mxu0 %v1385
    %1462 = vmatpush1.msra.mxu0 %v1384
    %1463 = vmatprep.subr.mxu0 %v1387
    %1464 = vmatpush1.msra.mxu0 %v1386
    %1465 = vmatprep.subr.mxu0 %v1389
    %1466 = vmatpush1.msra.mxu0 %v1388
    %1467 = vmatprep.subr.mxu0 %v1391
    %1468 = vmatpush1.msra.mxu0 %v1390
    %1469 = vmatprep.subr.mxu0 %v1393
    %1470 = vmatpush1.msra.mxu0 %v1392
    %1471 = vmatprep.subr.mxu0 %v1395
    %1472 = vmatpush1.msra.mxu0 %v1394
    %1473 = vmatprep.subr.mxu0 %v1397
    %1474 = vmatpush1.msra.mxu0 %v1396
    %1475 = vmatprep.subr.mxu0 %v1399
    %1476 = vmatpush1.msra.mxu0 %v1398
    %1477 = vmatprep.mubr.f32.mxu0 %v1334
    %1478 = vmatmul.mubr.f32.gmra.mrb[0].mxu0 %v1333
    %v1479 = vpop.f32.mrb[0].mxu0
    %v1480 = vadd.f32 %v1406, %v1479
    %v1481 = vpop.f32.mrb[0].mxu0
    %v1482 = vadd.f32 %v1410, %v1481
    %1483 = vdwg.mxu0
    %vm1484 = vcmp.ge.f32.partialorder %v1480, 0.0
    %vm1485 = vcmp.ge.f32.partialorder %v1482, 0.0
    %v1486 = vmul.f32 %v1480, 0.01
    %v1487 = vmul.f32 %v1482, 0.01
    %v1488 = vsel %vm1484, %v1480, %v1486
    %v1489 = vsel %vm1485, %v1482, %v1487
    %s1490 = scalar_lea.vmem %s5, 5
    %v1491 = vld [vmem:[%s1490] ss:$8 sm:$0x3]
    %v1493 = vlaneseq
    %v1494 = vshrl.u32 %v1493, 7
    %v1495 = vsub.s32 0, %v1494
    %v1496 = vrot.slane %v1491, %v1495
    %v1497 = vlaneseq
    %v1498 = vshrl.u32 %v1497, 7
    %v1499 = vsub.s32 1, %v1498
    %v1500 = vrot.slane %v1491, %v1499
    %v1503 = vmul.f32 %v1488, %v1496
    %v1504 = vmul.f32 %v1489, %v1500
    %v1505 = vadd.f32 %v1503, %v1504
    %1506 = vadd.xlane.f32.xlu0 %v1505
    %v1507 = vpop.xlane.xlu0 %1506
    %s1508 = sld [smem:[#allocation8 + $0x280]]
    %v1509 = vstv %s1508
    %v1510 = vadd.f32 %v1507, %v1509
    %s1511 = scalar_lea.vmem %s6, 5
    %v1512 = vld [vmem:[%s1511] ss:$8 sm:$0x3]
    %v1514 = vlaneseq
    %v1515 = vshrl.u32 %v1514, 7
    %v1516 = vsub.s32 0, %v1515
    %v1517 = vrot.slane %v1512, %v1516
    %v1518 = vlaneseq
    %v1519 = vshrl.u32 %v1518, 7
    %v1520 = vsub.s32 1, %v1519
    %v1521 = vrot.slane %v1512, %v1520
    %v1524 = vmul.f32 %v1488, %v1517
    %v1525 = vmul.f32 %v1489, %v1521
    %v1526 = vadd.f32 %v1524, %v1525
    %1527 = vadd.xlane.f32.xlu0 %v1526
    %v1528 = vpop.xlane.xlu0 %1527
    %s1529 = sld [smem:[#allocation8 + $0x281]]
    %v1530 = vstv %s1529
    %v1531 = vadd.f32 %v1528, %v1530
    %v1532 = vtanh.pop %v1510
    %v1533 = vmul.f32 %v1532, 1.442695
    %v1534 = vpow.pop %v1533
    %v1535 = vmul.f32 %v1048, %v1534
    %v1536 = vadd.f32 %v1535, %v1531
    %v1537 = vadd.f32 %v1293, %v1532
    %v1538 = vlaneseq
    %v1539 = vand.u32 %v1538, 127
    %vm1540 = vcmp.eq.s32.totalorder %v1539, 0
    %vm1541 = vcmp.eq.s32.totalorder %v1539, 1
    %vm1542 = vcmp.eq.s32.totalorder %v1539, 2
    %v1543 = vsel %vm1542, %v1537, 0.0
    %1545 = vset.pattern.permute.xlu0 1
    %1546 = vperm.xlu0 %1545, %v1536
    %v1547 = vpop.permute.xlu0 %1546
    %v1549 = vsel %vm1541, %v1547, %v1543
    %v1550 = vsel %vm1540, %v1299, %v1549
    %1551 = vst [vmem:[%s8] sm:$0xff] %v1550
    // Predicated region
    $region50: #{_realnvp_forward.1} parent=1 // pred_check
      _
    $region51: #{_realnvp_forward.1} parent=1 // pred_check_branch
      %1553 = sbr.rel (0) target = $region53
    $region52: #{_realnvp_forward.1} parent=1 // pred_region
      _
    $region53: #{_realnvp_forward.1} parent=1 // pred_fallthru
      _
    // Predicated region
    $region54: #{_realnvp_forward.1} parent=1 // pred_check
      _
    $region55: #{_realnvp_forward.1} parent=1 // pred_check_branch
      %1555 = sbr.rel (0) target = $region57
    $region56: #{_realnvp_forward.1} parent=1 // pred_region
      _
    $region57: #{_realnvp_forward.1} parent=1 // pred_fallthru
      _
    %1556 = vsyncpa [#allocation3], 1
    %1557 = vsyncpa [#allocation6], 1
    %1558 = vsyncpa [#allocation4], 1

</llo_original>
